<compile_context>
chip_gen: v7x
topology: tpu7x:2x2x1
jax: 0.10.0
libtpu: 0.0.40
codegen_flags: <defaults>
</compile_context>

<pallas_src>
import jax
import jax.numpy as jnp
import numpy as np
from jax.experimental import pallas as pl
from jax.experimental.pallas import tpu as pltpu


# ----------------------------- Pallas kernel --------------------------------
def cvae_kernel(
    # streamed per-batch-tile inputs
    x_ref, y_ref, eps_ref,
    # VMEM-resident weights (bf16)
    we1x_ref, wy_ref, we2_ref, wmulv_ref, wd1z_ref, wd2_ref, wout_ref,
    # VMEM-resident biases (f32)
    be1_ref, be2_ref, bmulv_ref, bd1_ref, bd2_ref, bout_ref,
    # outputs
    xres_ref, mulv_ref,
):
    f32 = jnp.float32
    bf16 = jnp.bfloat16
    hidden = we2_ref.shape[0]
    z_dim = eps_ref.shape[1]

    # --- fused one-hot contributions for encoder L1 and decoder L1 (one tiny matmul) ---
    y_contrib = jnp.dot(y_ref[...].astype(bf16), wy_ref[...], preferred_element_type=f32)
    y_enc = y_contrib[:, :hidden]
    y_dec = y_contrib[:, hidden:]

    # --- encoder MLP (relu, relu) ---
    h = jnp.dot(x_ref[...].astype(bf16), we1x_ref[...], preferred_element_type=f32)
    h = jnp.maximum(h + y_enc + be1_ref[...], 0.0)
    h = jnp.dot(h.astype(bf16), we2_ref[...], preferred_element_type=f32) + be2_ref[...]
    h = jnp.maximum(h, 0.0)

    # --- fused mu | logvar head (tanh) ---
    mulv = jnp.tanh(
        jnp.dot(h.astype(bf16), wmulv_ref[...], preferred_element_type=f32) + bmulv_ref[...])
    mu = mulv[:, :z_dim]
    logvar = mulv[:, z_dim:]

    # --- reparameterization exactly as in the module: z = mu + eps * exp(logvar) ---
    z = mu + eps_ref[...] * jnp.exp(logvar)

    # --- decoder MLP (relu, relu) ---
    d = jnp.dot(z.astype(bf16), wd1z_ref[...], preferred_element_type=f32)
    d = jnp.maximum(d + y_dec + bd1_ref[...], 0.0)
    d = jnp.dot(d.astype(bf16), wd2_ref[...], preferred_element_type=f32) + bd2_ref[...]
    d = jnp.maximum(d, 0.0)

    # --- output head Dense(d_mlp, input_dim, 'tanh') ---
    xres_ref[...] = jnp.tanh(
        jnp.dot(d.astype(bf16), wout_ref[...], preferred_element_type=f32) + bout_ref[...])
    mulv_ref[...] = mulv


# ------------------------------ wrapper --------------------------------------
def cvae_forward(x, y_oh, eps, weights, biases, *, tb=128):
    """x: [B, input_dim] f32, y_oh: [B, n_class] f32 one-hot, eps: [B, z_dim] f32."""
    B, input_dim = x.shape
    n_class = y_oh.shape[1]
    z_dim = eps.shape[1]

    grid_b = pl.cdiv(B, tb)
    bp = grid_b * tb
    if bp != B:  # pad batch to a multiple of the tile (padded rows discarded below)
        pad = ((0, bp - B), (0, 0))
        x = jnp.pad(x, pad)
        y_oh = jnp.pad(y_oh, pad)
        eps = jnp.pad(eps, pad)

    def batch_spec(feat):
        return pl.BlockSpec((tb, feat), lambda i: (i, 0))

    def resident_spec(arr):
        return pl.BlockSpec(arr.shape, lambda i: (0, 0))

    in_specs = (
        [batch_spec(input_dim), batch_spec(n_class), batch_spec(z_dim)]
        + [resident_spec(w) for w in weights]
        + [resident_spec(b) for b in biases]
    )
    out_specs = (batch_spec(input_dim), batch_spec(2 * z_dim))
    out_shape = (
        jax.ShapeDtypeStruct((bp, input_dim), jnp.float32),   # x_res
        jax.ShapeDtypeStruct((bp, 2 * z_dim), jnp.float32),   # [mu | logvar] lane-dense slab
    )

    x_res, mulv = pl.pallas_call(
        cvae_kernel,
        grid=(grid_b,),
        in_specs=in_specs,
        out_specs=out_specs,
        out_shape=out_shape,
        compiler_params=pltpu.CompilerParams(
            dimension_semantics=("parallel",)),
    )(x, y_oh, eps, *weights, *biases)

    x_res = x_res[:B]
    mu = mulv[:B, :z_dim]
    logvar = mulv[:B, z_dim:]
    return x_res, mu, logvar


# ------------------------- parameter construction ----------------------------
def _linear_params(key, fan_in, fan_out):
    """PyTorch nn.Linear default init: U(-1/sqrt(fan_in), 1/sqrt(fan_in))."""
    kw, kb = jax.random.split(key)
    bound = 1.0 / np.sqrt(fan_in)
    w = jax.random.uniform(kw, (fan_in, fan_out), jnp.float32, -bound, bound)
    b = jax.random.uniform(kb, (1, fan_out), jnp.float32, -bound, bound)
    return w, b


def build_params(key, input_dim, n_class, z_dim, hidden):
    """Build module-faithful params, then fuse/split them for the kernel layout."""
    ks = jax.random.split(key, 7)
    enc_in = input_dim + n_class
    dec_in = z_dim + n_class

    we1, be1 = _linear_params(ks[0], enc_in, hidden)       # encoder layer 1 (relu)
    we2, be2 = _linear_params(ks[1], hidden, hidden)       # encoder layer 2 (relu)
    wmu, bmu = _linear_params(ks[2], hidden, z_dim)        # mu head (tanh)
    wlv, blv = _linear_params(ks[3], hidden, z_dim)        # logvar head (tanh)
    wd1, bd1 = _linear_params(ks[4], dec_in, hidden)       # decoder layer 1 (relu)
    wd2, bd2 = _linear_params(ks[5], hidden, hidden)       # decoder layer 2 (relu)
    wout, bout = _linear_params(ks[6], hidden, input_dim)  # output head (tanh)

    bf16 = jnp.bfloat16
    we1x = we1[:input_dim].astype(bf16)                    # x part of encoder L1
    we1y = we1[input_dim:]                                 # one-hot part of encoder L1
    wd1z = wd1[:z_dim].astype(bf16)                        # z part of decoder L1
    wd1y = wd1[z_dim:]                                     # one-hot part of decoder L1
    wy = jnp.concatenate([we1y, wd1y], axis=1).astype(bf16)       # [n_class, 2*hidden]
    wmulv = jnp.concatenate([wmu, wlv], axis=1).astype(bf16)      # [hidden, 2*z_dim]
    bmulv = jnp.concatenate([bmu, blv], axis=1)                   # [1, 2*z_dim]

    weights = (we1x, wy, we2.astype(bf16), wmulv, wd1z,
               wd2.astype(bf16), wout.astype(bf16))
    biases = (be1, be2, bmulv, bd1, bd2, bout)
    return weights, biases


# ---------------------------- pure-JAX reference ------------------------------
def cvae_reference(x, y_oh, eps, weights, biases):
    """Same math, same bf16-operand / f32-accumulate precision as the kernel."""
    we1x, wy, we2, wmulv, wd1z, wd2, wout = weights
    be1, be2, bmulv, bd1, bd2, bout = biases
    bf16, f32 = jnp.bfloat16, jnp.float32
    hidden = we2.shape[0]
    z_dim = eps.shape[1]

    def dot(a, b):
        return jnp.dot(a.astype(bf16), b, preferred_element_type=f32)

    y_contrib = dot(y_oh, wy)
    h = jnp.maximum(dot(x, we1x) + y_contrib[:, :hidden] + be1, 0.0)
    h = jnp.maximum(dot(h, we2) + be2, 0.0)
    mulv = jnp.tanh(dot(h, wmulv) + bmulv)
    mu, logvar = mulv[:, :z_dim], mulv[:, z_dim:]
    z = mu + eps * jnp.exp(logvar)
    d = jnp.maximum(dot(z, wd1z) + y_contrib[:, hidden:] + bd1, 0.0)
    d = jnp.maximum(dot(d, wd2) + bd2, 0.0)
    x_res = jnp.tanh(dot(d, wout) + bout)
    return x_res, mu, logvar


# ---------------------------------- main --------------------------------------
if __name__ == "__main__":
    # Small shapes consistent with the module's MLP forward; B=256 with TB=128
    # exercises the batch grid / pipelining (2 grid steps).
    B, input_dim, n_class, z_dim, hidden = 256, 16, 4, 8, 32

    key = jax.random.PRNGKey(0)
    kx, ky, ke, kp = jax.random.split(key, 4)
    x = jax.random.normal(kx, (B, input_dim), dtype=jnp.float32)
    y = jax.random.randint(ky, (B,), 0, n_class, dtype=jnp.int32)
    y_oh = jax.nn.one_hot(y, n_class, dtype=x.dtype)            # F.one_hot, cast to x dtype
    # epsilon = torch.randn(mu.size()) -> deterministic host-side normal noise here.
    # TODO(synk): optionally generate eps in-kernel via pltpu.prng_seed + stateful_normal
    #             to drop one HBM input stream per batch tile.
    eps = jax.random.normal(ke, (B, z_dim), dtype=jnp.float32)

    weights, biases = build_params(kp, input_dim, n_class, z_dim, hidden)

    x_res, mu, logvar = cvae_forward(x, y_oh, eps, weights, biases, tb=128)
    jax.block_until_ready((x_res, mu, logvar))

    # correctness check against a precision-matched pure-JAX reference
    xr_ref, mu_ref, lv_ref = cvae_reference(x, y_oh, eps, weights, biases)
    np.testing.assert_allclose(np.asarray(x_res), np.asarray(xr_ref), rtol=1e-2, atol=1e-2)
    np.testing.assert_allclose(np.asarray(mu), np.asarray(mu_ref), rtol=1e-2, atol=1e-2)
    np.testing.assert_allclose(np.asarray(logvar), np.asarray(lv_ref), rtol=1e-2, atol=1e-2)

    print("KERNEL_OK")
</pallas_src>

<mosaic_0001>
module attributes {stable_mosaic.version = 11 : i64} {
  func.func @cvae_kernel(%arg0: i32, %arg1: memref<128x16xf32, #tpu.memory_space<vmem>>, %arg2: memref<128x4xf32, #tpu.memory_space<vmem>>, %arg3: memref<128x8xf32, #tpu.memory_space<vmem>>, %arg4: memref<16x32xbf16, #tpu.memory_space<vmem>>, %arg5: memref<4x64xbf16, #tpu.memory_space<vmem>>, %arg6: memref<32x32xbf16, #tpu.memory_space<vmem>>, %arg7: memref<32x16xbf16, #tpu.memory_space<vmem>>, %arg8: memref<8x32xbf16, #tpu.memory_space<vmem>>, %arg9: memref<32x32xbf16, #tpu.memory_space<vmem>>, %arg10: memref<32x16xbf16, #tpu.memory_space<vmem>>, %arg11: memref<1x32xf32, #tpu.memory_space<vmem>>, %arg12: memref<1x32xf32, #tpu.memory_space<vmem>>, %arg13: memref<1x16xf32, #tpu.memory_space<vmem>>, %arg14: memref<1x32xf32, #tpu.memory_space<vmem>>, %arg15: memref<1x32xf32, #tpu.memory_space<vmem>>, %arg16: memref<1x16xf32, #tpu.memory_space<vmem>>, %arg17: memref<128x16xf32, #tpu.memory_space<vmem>>, %arg18: memref<128x16xf32, #tpu.memory_space<vmem>>) attributes {dimension_semantics = [#tpu.dimension_semantics<parallel>], iteration_bounds = array<i64: 2>, scalar_prefetch = 0 : i64, scratch_operands = 0 : i64, tpu.core_type = #tpu.core_type<tc>, window_params = [{transform_indices = @transform_0, window_bounds = array<i64: 128, 16>}, {transform_indices = @transform_1, window_bounds = array<i64: 128, 4>}, {transform_indices = @transform_2, window_bounds = array<i64: 128, 8>}, {pipeline_mode = #tpu.pipeline_mode<synchronous>, transform_indices = @transform_3, window_bounds = array<i64: 16, 32>}, {pipeline_mode = #tpu.pipeline_mode<synchronous>, transform_indices = @transform_4, window_bounds = array<i64: 4, 64>}, {pipeline_mode = #tpu.pipeline_mode<synchronous>, transform_indices = @transform_5, window_bounds = array<i64: 32, 32>}, {pipeline_mode = #tpu.pipeline_mode<synchronous>, transform_indices = @transform_6, window_bounds = array<i64: 32, 16>}, {pipeline_mode = #tpu.pipeline_mode<synchronous>, transform_indices = @transform_7, window_bounds = array<i64: 8, 32>}, {pipeline_mode = #tpu.pipeline_mode<synchronous>, transform_indices = @transform_8, window_bounds = array<i64: 32, 32>}, {pipeline_mode = #tpu.pipeline_mode<synchronous>, transform_indices = @transform_9, window_bounds = array<i64: 32, 16>}, {pipeline_mode = #tpu.pipeline_mode<synchronous>, transform_indices = @transform_10, window_bounds = array<i64: 1, 32>}, {pipeline_mode = #tpu.pipeline_mode<synchronous>, transform_indices = @transform_11, window_bounds = array<i64: 1, 32>}, {pipeline_mode = #tpu.pipeline_mode<synchronous>, transform_indices = @transform_12, window_bounds = array<i64: 1, 16>}, {pipeline_mode = #tpu.pipeline_mode<synchronous>, transform_indices = @transform_13, window_bounds = array<i64: 1, 32>}, {pipeline_mode = #tpu.pipeline_mode<synchronous>, transform_indices = @transform_14, window_bounds = array<i64: 1, 32>}, {pipeline_mode = #tpu.pipeline_mode<synchronous>, transform_indices = @transform_15, window_bounds = array<i64: 1, 16>}, {transform_indices = @transform_16, window_bounds = array<i64: 128, 16>}, {transform_indices = @transform_17, window_bounds = array<i64: 128, 16>}]} {
    %c0 = arith.constant 0 : index
    %c0_0 = arith.constant 0 : index
    %0 = vector.load %arg2[%c0, %c0_0] : memref<128x4xf32, #tpu.memory_space<vmem>>, vector<128x4xf32>
    %1 = arith.truncf %0 : vector<128x4xf32> to vector<128x4xbf16>
    %c0_1 = arith.constant 0 : index
    %c0_2 = arith.constant 0 : index
    %2 = vector.load %arg5[%c0_1, %c0_2] : memref<4x64xbf16, #tpu.memory_space<vmem>>, vector<4x64xbf16>
    %cst = arith.constant dense<0.000000e+00> : vector<128x64xf32>
    %3 = tpu.matmul %1, %2, %cst {dimension_numbers = #tpu.dot_dimension_numbers<[1], [0], [0], [1], [0, 0, 1, 1], [], []>} : vector<128x4xbf16>, vector<4x64xbf16>, vector<128x64xf32> -> vector<128x64xf32>
    %4 = vector.extract_strided_slice %3 {offsets = [0, 0], sizes = [128, 32], strides = [1, 1]} : vector<128x64xf32> to vector<128x32xf32>
    %5 = vector.extract_strided_slice %3 {offsets = [0, 32], sizes = [128, 32], strides = [1, 1]} : vector<128x64xf32> to vector<128x32xf32>
    %c0_3 = arith.constant 0 : index
    %c0_4 = arith.constant 0 : index
    %6 = vector.load %arg1[%c0_3, %c0_4] : memref<128x16xf32, #tpu.memory_space<vmem>>, vector<128x16xf32>
    %7 = arith.truncf %6 : vector<128x16xf32> to vector<128x16xbf16>
    %c0_5 = arith.constant 0 : index
    %c0_6 = arith.constant 0 : index
    %8 = vector.load %arg4[%c0_5, %c0_6] : memref<16x32xbf16, #tpu.memory_space<vmem>>, vector<16x32xbf16>
    %cst_7 = arith.constant dense<0.000000e+00> : vector<128x32xf32>
    %9 = tpu.matmul %7, %8, %cst_7 {dimension_numbers = #tpu.dot_dimension_numbers<[1], [0], [0], [1], [0, 0, 1, 1], [], []>} : vector<128x16xbf16>, vector<16x32xbf16>, vector<128x32xf32> -> vector<128x32xf32>
    %10 = arith.addf %9, %4 : vector<128x32xf32>
    %c0_8 = arith.constant 0 : index
    %c0_9 = arith.constant 0 : index
    %11 = vector.load %arg11[%c0_8, %c0_9] : memref<1x32xf32, #tpu.memory_space<vmem>>, vector<1x32xf32>
    %12 = vector.broadcast %11 : vector<1x32xf32> to vector<128x32xf32>
    %13 = arith.addf %10, %12 : vector<128x32xf32>
    %cst_10 = arith.constant 0.000000e+00 : f32
    %14 = vector.broadcast %cst_10 : f32 to vector<128x32xf32>
    %15 = arith.maximumf %13, %14 : vector<128x32xf32>
    %16 = arith.truncf %15 : vector<128x32xf32> to vector<128x32xbf16>
    %c0_11 = arith.constant 0 : index
    %c0_12 = arith.constant 0 : index
    %17 = vector.load %arg6[%c0_11, %c0_12] : memref<32x32xbf16, #tpu.memory_space<vmem>>, vector<32x32xbf16>
    %cst_13 = arith.constant dense<0.000000e+00> : vector<128x32xf32>
    %18 = tpu.matmul %16, %17, %cst_13 {dimension_numbers = #tpu.dot_dimension_numbers<[1], [0], [0], [1], [0, 0, 1, 1], [], []>} : vector<128x32xbf16>, vector<32x32xbf16>, vector<128x32xf32> -> vector<128x32xf32>
    %c0_14 = arith.constant 0 : index
    %c0_15 = arith.constant 0 : index
    %19 = vector.load %arg12[%c0_14, %c0_15] : memref<1x32xf32, #tpu.memory_space<vmem>>, vector<1x32xf32>
    %20 = vector.broadcast %19 : vector<1x32xf32> to vector<128x32xf32>
    %21 = arith.addf %18, %20 : vector<128x32xf32>
    %cst_16 = arith.constant 0.000000e+00 : f32
    %22 = vector.broadcast %cst_16 : f32 to vector<128x32xf32>
    %23 = arith.maximumf %21, %22 : vector<128x32xf32>
    %24 = arith.truncf %23 : vector<128x32xf32> to vector<128x32xbf16>
    %c0_17 = arith.constant 0 : index
    %c0_18 = arith.constant 0 : index
    %25 = vector.load %arg7[%c0_17, %c0_18] : memref<32x16xbf16, #tpu.memory_space<vmem>>, vector<32x16xbf16>
    %cst_19 = arith.constant dense<0.000000e+00> : vector<128x16xf32>
    %26 = tpu.matmul %24, %25, %cst_19 {dimension_numbers = #tpu.dot_dimension_numbers<[1], [0], [0], [1], [0, 0, 1, 1], [], []>} : vector<128x32xbf16>, vector<32x16xbf16>, vector<128x16xf32> -> vector<128x16xf32>
    %c0_20 = arith.constant 0 : index
    %c0_21 = arith.constant 0 : index
    %27 = vector.load %arg13[%c0_20, %c0_21] : memref<1x16xf32, #tpu.memory_space<vmem>>, vector<1x16xf32>
    %28 = vector.broadcast %27 : vector<1x16xf32> to vector<128x16xf32>
    %29 = arith.addf %26, %28 : vector<128x16xf32>
    %30 = math.tanh %29 : vector<128x16xf32>
    %31 = vector.extract_strided_slice %30 {offsets = [0, 0], sizes = [128, 8], strides = [1, 1]} : vector<128x16xf32> to vector<128x8xf32>
    %32 = vector.extract_strided_slice %30 {offsets = [0, 8], sizes = [128, 8], strides = [1, 1]} : vector<128x16xf32> to vector<128x8xf32>
    %c0_22 = arith.constant 0 : index
    %c0_23 = arith.constant 0 : index
    %33 = vector.load %arg3[%c0_22, %c0_23] : memref<128x8xf32, #tpu.memory_space<vmem>>, vector<128x8xf32>
    %34 = math.exp %32 : vector<128x8xf32>
    %35 = arith.mulf %33, %34 : vector<128x8xf32>
    %36 = arith.addf %31, %35 : vector<128x8xf32>
    %37 = arith.truncf %36 : vector<128x8xf32> to vector<128x8xbf16>
    %c0_24 = arith.constant 0 : index
    %c0_25 = arith.constant 0 : index
    %38 = vector.load %arg8[%c0_24, %c0_25] : memref<8x32xbf16, #tpu.memory_space<vmem>>, vector<8x32xbf16>
    %cst_26 = arith.constant dense<0.000000e+00> : vector<128x32xf32>
    %39 = tpu.matmul %37, %38, %cst_26 {dimension_numbers = #tpu.dot_dimension_numbers<[1], [0], [0], [1], [0, 0, 1, 1], [], []>} : vector<128x8xbf16>, vector<8x32xbf16>, vector<128x32xf32> -> vector<128x32xf32>
    %40 = arith.addf %39, %5 : vector<128x32xf32>
    %c0_27 = arith.constant 0 : index
    %c0_28 = arith.constant 0 : index
    %41 = vector.load %arg14[%c0_27, %c0_28] : memref<1x32xf32, #tpu.memory_space<vmem>>, vector<1x32xf32>
    %42 = vector.broadcast %41 : vector<1x32xf32> to vector<128x32xf32>
    %43 = arith.addf %40, %42 : vector<128x32xf32>
    %cst_29 = arith.constant 0.000000e+00 : f32
    %44 = vector.broadcast %cst_29 : f32 to vector<128x32xf32>
    %45 = arith.maximumf %43, %44 : vector<128x32xf32>
    %46 = arith.truncf %45 : vector<128x32xf32> to vector<128x32xbf16>
    %c0_30 = arith.constant 0 : index
    %c0_31 = arith.constant 0 : index
    %47 = vector.load %arg9[%c0_30, %c0_31] : memref<32x32xbf16, #tpu.memory_space<vmem>>, vector<32x32xbf16>
    %cst_32 = arith.constant dense<0.000000e+00> : vector<128x32xf32>
    %48 = tpu.matmul %46, %47, %cst_32 {dimension_numbers = #tpu.dot_dimension_numbers<[1], [0], [0], [1], [0, 0, 1, 1], [], []>} : vector<128x32xbf16>, vector<32x32xbf16>, vector<128x32xf32> -> vector<128x32xf32>
    %c0_33 = arith.constant 0 : index
    %c0_34 = arith.constant 0 : index
    %49 = vector.load %arg15[%c0_33, %c0_34] : memref<1x32xf32, #tpu.memory_space<vmem>>, vector<1x32xf32>
    %50 = vector.broadcast %49 : vector<1x32xf32> to vector<128x32xf32>
    %51 = arith.addf %48, %50 : vector<128x32xf32>
    %cst_35 = arith.constant 0.000000e+00 : f32
    %52 = vector.broadcast %cst_35 : f32 to vector<128x32xf32>
    %53 = arith.maximumf %51, %52 : vector<128x32xf32>
    %54 = arith.truncf %53 : vector<128x32xf32> to vector<128x32xbf16>
    %c0_36 = arith.constant 0 : index
    %c0_37 = arith.constant 0 : index
    %55 = vector.load %arg10[%c0_36, %c0_37] : memref<32x16xbf16, #tpu.memory_space<vmem>>, vector<32x16xbf16>
    %cst_38 = arith.constant dense<0.000000e+00> : vector<128x16xf32>
    %56 = tpu.matmul %54, %55, %cst_38 {dimension_numbers = #tpu.dot_dimension_numbers<[1], [0], [0], [1], [0, 0, 1, 1], [], []>} : vector<128x32xbf16>, vector<32x16xbf16>, vector<128x16xf32> -> vector<128x16xf32>
    %c0_39 = arith.constant 0 : index
    %c0_40 = arith.constant 0 : index
    %57 = vector.load %arg16[%c0_39, %c0_40] : memref<1x16xf32, #tpu.memory_space<vmem>>, vector<1x16xf32>
    %58 = vector.broadcast %57 : vector<1x16xf32> to vector<128x16xf32>
    %59 = arith.addf %56, %58 : vector<128x16xf32>
    %60 = math.tanh %59 : vector<128x16xf32>
    %c0_41 = arith.constant 0 : index
    %c0_42 = arith.constant 0 : index
    %61 = vector.load %arg17[%c0_41, %c0_42] : memref<128x16xf32, #tpu.memory_space<vmem>>, vector<128x16xf32>
    tpu.vector_store %arg17[%c0_41, %c0_42], %60 {strides = array<i32>} : memref<128x16xf32, #tpu.memory_space<vmem>>, vector<128x16xf32>,
    %c0_43 = arith.constant 0 : index
    %c0_44 = arith.constant 0 : index
    %62 = vector.load %arg18[%c0_43, %c0_44] : memref<128x16xf32, #tpu.memory_space<vmem>>, vector<128x16xf32>
    tpu.vector_store %arg18[%c0_43, %c0_44], %30 {strides = array<i32>} : memref<128x16xf32, #tpu.memory_space<vmem>>, vector<128x16xf32>,
    return
  }
  func.func @transform_0(%arg0: i32) -> (i32, i32) {
    %c0_i32 = arith.constant 0 : i32
    %c0_i32_0 = arith.constant 0 : i32
    return %arg0, %c0_i32 : i32, i32
  }
  func.func @transform_1(%arg0: i32) -> (i32, i32) {
    %c0_i32 = arith.constant 0 : i32
    %c0_i32_0 = arith.constant 0 : i32
    return %arg0, %c0_i32 : i32, i32
  }
  func.func @transform_2(%arg0: i32) -> (i32, i32) {
    %c0_i32 = arith.constant 0 : i32
    %c0_i32_0 = arith.constant 0 : i32
    return %arg0, %c0_i32 : i32, i32
  }
  func.func @transform_3(%arg0: i32) -> (i32, i32) {
    %c0_i32 = arith.constant 0 : i32
    %c0_i32_0 = arith.constant 0 : i32
    %c0_i32_1 = arith.constant 0 : i32
    return %c0_i32, %c0_i32_0 : i32, i32
  }
  func.func @transform_4(%arg0: i32) -> (i32, i32) {
    %c0_i32 = arith.constant 0 : i32
    %c0_i32_0 = arith.constant 0 : i32
    %c0_i32_1 = arith.constant 0 : i32
    return %c0_i32, %c0_i32_0 : i32, i32
  }
  func.func @transform_5(%arg0: i32) -> (i32, i32) {
    %c0_i32 = arith.constant 0 : i32
    %c0_i32_0 = arith.constant 0 : i32
    %c0_i32_1 = arith.constant 0 : i32
    return %c0_i32, %c0_i32_0 : i32, i32
  }
  func.func @transform_6(%arg0: i32) -> (i32, i32) {
    %c0_i32 = arith.constant 0 : i32
    %c0_i32_0 = arith.constant 0 : i32
    %c0_i32_1 = arith.constant 0 : i32
    return %c0_i32, %c0_i32_0 : i32, i32
  }
  func.func @transform_7(%arg0: i32) -> (i32, i32) {
    %c0_i32 = arith.constant 0 : i32
    %c0_i32_0 = arith.constant 0 : i32
    %c0_i32_1 = arith.constant 0 : i32
    return %c0_i32, %c0_i32_0 : i32, i32
  }
  func.func @transform_8(%arg0: i32) -> (i32, i32) {
    %c0_i32 = arith.constant 0 : i32
    %c0_i32_0 = arith.constant 0 : i32
    %c0_i32_1 = arith.constant 0 : i32
    return %c0_i32, %c0_i32_0 : i32, i32
  }
  func.func @transform_9(%arg0: i32) -> (i32, i32) {
    %c0_i32 = arith.constant 0 : i32
    %c0_i32_0 = arith.constant 0 : i32
    %c0_i32_1 = arith.constant 0 : i32
    return %c0_i32, %c0_i32_0 : i32, i32
  }
  func.func @transform_10(%arg0: i32) -> (i32, i32) {
    %c0_i32 = arith.constant 0 : i32
    %c0_i32_0 = arith.constant 0 : i32
    %c0_i32_1 = arith.constant 0 : i32
    return %c0_i32, %c0_i32_0 : i32, i32
  }
  func.func @transform_11(%arg0: i32) -> (i32, i32) {
    %c0_i32 = arith.constant 0 : i32
    %c0_i32_0 = arith.constant 0 : i32
    %c0_i32_1 = arith.constant 0 : i32
    return %c0_i32, %c0_i32_0 : i32, i32
  }
  func.func @transform_12(%arg0: i32) -> (i32, i32) {
    %c0_i32 = arith.constant 0 : i32
    %c0_i32_0 = arith.constant 0 : i32
    %c0_i32_1 = arith.constant 0 : i32
    return %c0_i32, %c0_i32_0 : i32, i32
  }
  func.func @transform_13(%arg0: i32) -> (i32, i32) {
    %c0_i32 = arith.constant 0 : i32
    %c0_i32_0 = arith.constant 0 : i32
    %c0_i32_1 = arith.constant 0 : i32
    return %c0_i32, %c0_i32_0 : i32, i32
  }
  func.func @transform_14(%arg0: i32) -> (i32, i32) {
    %c0_i32 = arith.constant 0 : i32
    %c0_i32_0 = arith.constant 0 : i32
    %c0_i32_1 = arith.constant 0 : i32
    return %c0_i32, %c0_i32_0 : i32, i32
  }
  func.func @transform_15(%arg0: i32) -> (i32, i32) {
    %c0_i32 = arith.constant 0 : i32
    %c0_i32_0 = arith.constant 0 : i32
    %c0_i32_1 = arith.constant 0 : i32
    return %c0_i32, %c0_i32_0 : i32, i32
  }
  func.func @transform_16(%arg0: i32) -> (i32, i32) {
    %c0_i32 = arith.constant 0 : i32
    %c0_i32_0 = arith.constant 0 : i32
    return %arg0, %c0_i32 : i32, i32
  }
  func.func @transform_17(%arg0: i32) -> (i32, i32) {
    %c0_i32 = arith.constant 0 : i32
    %c0_i32_0 = arith.constant 0 : i32
    return %arg0, %c0_i32 : i32, i32
  }
}

</mosaic_0001>

<llo_original>
// kernel: tpu_custom_call.1
$region0: #{tpu_custom_call.1}
  #allocation0 [shape = 'u32[]', space=smem, size = 0x4, offset = 0x4, fixed_abs, tag = 'smem constant byte address 0x4 - core index']
  #allocation1 [shape = 'u32[144,128]{1,0:T(1,128)}', space=vmem, size = 0x12000, scoped, tag = 'internal scratch']
  %s0 = inlined_call_operand.vmem [shape: f32[256,16], index: 0, kind: input, shape index: {}]
  %s1 = inlined_call_operand.vmem [shape: f32[256,4], index: 1, kind: input, shape index: {}]
  %s2 = inlined_call_operand.vmem [shape: f32[256,8], index: 2, kind: input, shape index: {}]
  %s3 = inlined_call_operand.vmem [shape: bf16[16,32], index: 3, kind: input, shape index: {}]
  %s4 = inlined_call_operand.vmem [shape: bf16[4,64], index: 4, kind: input, shape index: {}]
  %s5 = inlined_call_operand.vmem [shape: bf16[32,32], index: 5, kind: input, shape index: {}]
  %s6 = inlined_call_operand.vmem [shape: bf16[32,16], index: 6, kind: input, shape index: {}]
  %s7 = inlined_call_operand.vmem [shape: bf16[8,32], index: 7, kind: input, shape index: {}]
  %s8 = inlined_call_operand.vmem [shape: bf16[32,32], index: 8, kind: input, shape index: {}]
  %s9 = inlined_call_operand.vmem [shape: bf16[32,16], index: 9, kind: input, shape index: {}]
  %s10 = inlined_call_operand.vmem [shape: f32[1,32], index: 10, kind: input, shape index: {}]
  %s11 = inlined_call_operand.vmem [shape: f32[1,32], index: 11, kind: input, shape index: {}]
  %s12 = inlined_call_operand.vmem [shape: f32[1,16], index: 12, kind: input, shape index: {}]
  %s13 = inlined_call_operand.vmem [shape: f32[1,32], index: 13, kind: input, shape index: {}]
  %s14 = inlined_call_operand.vmem [shape: f32[1,32], index: 14, kind: input, shape index: {}]
  %s15 = inlined_call_operand.vmem [shape: f32[1,16], index: 15, kind: input, shape index: {}]
  %s16 = inlined_call_operand.vmem [shape: f32[256,16], index: 16, kind: output, shape index: {0}]
  %s17 = inlined_call_operand.vmem [shape: f32[256,16], index: 17, kind: output, shape index: {1}]
  %18 = xla_tuple %s16, %s17
  %s19 = sld [smem:[#allocation0]]
  $region105: #{tpu_custom_call.1} parent=0
    _
  %s21 = ssub.s32 1, %s19
  %s22 = scalar_select 0, %s21, %s19
  loop: start=0, step=1, limit=4
  $region2: #{tpu_custom_call.1} parent=0 // loop_pre_header
    _
  $region3: #{tpu_custom_call.1} parent=0 // loop_header
    %s24 = sphi 0, %s28
    %p25 = scmp.ge.s32.totalorder %s24, 4
    %s34 = sphi 0, %s36
    %s37 = sphi 0, %s34
    %s38 = sphi 0, %s37
    %s54 = sphi 0, %s38
    %s60 = sphi 0, %s62
    %s63 = sphi 0, %s60
    %s64 = sphi 0, %s63
    %s80 = sphi 0, %s64
    %s86 = sphi 0, %s88
    %s89 = sphi 0, %s86
    %s90 = sphi 0, %s89
    %s106 = sphi 0, %s90
    %s110 = sphi 0, %s110
    %s112 = sphi 0, %s110
    %s113 = sphi 0, %s112
    %s127 = sphi 0, %s113
    %s131 = sphi 0, %s131
    %s133 = sphi 0, %s131
    %s134 = sphi 0, %s133
    %s148 = sphi 0, %s134
    %s152 = sphi 0, %s152
    %s154 = sphi 0, %s152
    %s155 = sphi 0, %s154
    %s169 = sphi 0, %s155
    %s173 = sphi 0, %s173
    %s175 = sphi 0, %s173
    %s176 = sphi 0, %s175
    %s190 = sphi 0, %s176
    %s194 = sphi 0, %s194
    %s196 = sphi 0, %s194
    %s197 = sphi 0, %s196
    %s211 = sphi 0, %s197
    %s215 = sphi 0, %s215
    %s217 = sphi 0, %s215
    %s218 = sphi 0, %s217
    %s232 = sphi 0, %s218
    %s236 = sphi 0, %s236
    %s238 = sphi 0, %s236
    %s239 = sphi 0, %s238
    %s253 = sphi 0, %s239
    %s257 = sphi 0, %s257
    %s259 = sphi 0, %s257
    %s260 = sphi 0, %s259
    %s274 = sphi 0, %s260
    %s278 = sphi 0, %s278
    %s280 = sphi 0, %s278
    %s281 = sphi 0, %s280
    %s295 = sphi 0, %s281
    %s299 = sphi 0, %s299
    %s301 = sphi 0, %s299
    %s302 = sphi 0, %s301
    %s316 = sphi 0, %s302
    %s320 = sphi 0, %s320
    %s322 = sphi 0, %s320
    %s323 = sphi 0, %s322
    %s337 = sphi 0, %s323
    %s341 = sphi 0, %s341
    %s343 = sphi 0, %s341
    %s344 = sphi 0, %s343
    %s358 = sphi 0, %s344
    %s362 = sphi 0, %s362
    %s364 = sphi 0, %s362
    %s365 = sphi 0, %s364
    %s379 = sphi 0, %s365
    %s385 = sphi 0, %s387
    %s388 = sphi 0, %s385
    %s389 = sphi 0, %s388
    %s405 = sphi 0, %s389
    %s411 = sphi 0, %s413
    %s414 = sphi 0, %s411
    %s415 = sphi 0, %s414
    %s431 = sphi 0, %s415
  $region4: #{tpu_custom_call.1} parent=0 // loop_header_branch
    %27 = sbr.rel (%p25) target = $region8
  $region5: #{tpu_custom_call.1} parent=0 // loop_body
    %s29 = ssub.s32 %s24, 1
    %s30 = ssub.s32 %s24, 2
    %s31 = sadd.s32 %s24, 1
    %s32 = ssub.s32 %s24, %s31
    %p33 = scmp.eq.s32.totalorder %s32, 0
    %s35 = sadd.s32 %s34, 1
    %s36 = scalar_select %p33, %s34, %s35
    %p39 = pneg %p33
    %p40 = scmp.eq.s32.totalorder %s24, 1
    %p41 = por %p39, %p40
    %p42 = scmp.ne.s32.totalorder %s34, %s37
    %p43 = scmp.eq.s32.totalorder %s24, 0
    %p44 = por %p42, %p43
    %p45 = scmp.ne.s32.totalorder %s34, %s37
    %p46 = scmp.eq.s32.totalorder %s29, 1
    %p47 = por %p45, %p46
    %p48 = scmp.ne.s32.totalorder %s37, %s38
    %p49 = scmp.eq.s32.totalorder %s29, 0
    %p50 = por %p48, %p49
    %p51 = scmp.ne.s32.totalorder %s37, %s38
    %p52 = scmp.eq.s32.totalorder %s30, 1
    %p53 = por %p51, %p52
    %p55 = scmp.ne.s32.totalorder %s38, %s54
    %p56 = scmp.eq.s32.totalorder %s30, 0
    %p57 = por %p55, %p56
    %s58 = ssub.s32 %s24, %s31
    %p59 = scmp.eq.s32.totalorder %s58, 0
    %s61 = sadd.s32 %s60, 1
    %s62 = scalar_select %p59, %s60, %s61
    %p65 = pneg %p59
    %p66 = scmp.eq.s32.totalorder %s24, 1
    %p67 = por %p65, %p66
    %p68 = scmp.ne.s32.totalorder %s60, %s63
    %p69 = scmp.eq.s32.totalorder %s24, 0
    %p70 = por %p68, %p69
    %p71 = scmp.ne.s32.totalorder %s60, %s63
    %p72 = scmp.eq.s32.totalorder %s29, 1
    %p73 = por %p71, %p72
    %p74 = scmp.ne.s32.totalorder %s63, %s64
    %p75 = scmp.eq.s32.totalorder %s29, 0
    %p76 = por %p74, %p75
    %p77 = scmp.ne.s32.totalorder %s63, %s64
    %p78 = scmp.eq.s32.totalorder %s30, 1
    %p79 = por %p77, %p78
    %p81 = scmp.ne.s32.totalorder %s64, %s80
    %p82 = scmp.eq.s32.totalorder %s30, 0
    %p83 = por %p81, %p82
    %s84 = ssub.s32 %s24, %s31
    %p85 = scmp.eq.s32.totalorder %s84, 0
    %s87 = sadd.s32 %s86, 1
    %s88 = scalar_select %p85, %s86, %s87
    %p91 = pneg %p85
    %p92 = scmp.eq.s32.totalorder %s24, 1
    %p93 = por %p91, %p92
    %p94 = scmp.ne.s32.totalorder %s86, %s89
    %p95 = scmp.eq.s32.totalorder %s24, 0
    %p96 = por %p94, %p95
    %p97 = scmp.ne.s32.totalorder %s86, %s89
    %p98 = scmp.eq.s32.totalorder %s29, 1
    %p99 = por %p97, %p98
    %p100 = scmp.ne.s32.totalorder %s89, %s90
    %p101 = scmp.eq.s32.totalorder %s29, 0
    %p102 = por %p100, %p101
    %p103 = scmp.ne.s32.totalorder %s89, %s90
    %p104 = scmp.eq.s32.totalorder %s30, 1
    %p105 = por %p103, %p104
    %p107 = scmp.ne.s32.totalorder %s90, %s106
    %p108 = scmp.eq.s32.totalorder %s30, 0
    %p109 = por %p107, %p108
    %s111 = sadd.s32 %s110, 1
    %p114 = scmp.eq.s32.totalorder %s24, 1
    %p115 = scmp.ne.s32.totalorder %s110, %s112
    %p116 = scmp.eq.s32.totalorder %s24, 0
    %p117 = por %p115, %p116
    %p118 = scmp.ne.s32.totalorder %s110, %s112
    %p119 = scmp.eq.s32.totalorder %s29, 1
    %p120 = por %p118, %p119
    %p121 = scmp.ne.s32.totalorder %s112, %s113
    %p122 = scmp.eq.s32.totalorder %s29, 0
    %p123 = por %p121, %p122
    %p124 = scmp.ne.s32.totalorder %s112, %s113
    %p125 = scmp.eq.s32.totalorder %s30, 1
    %p126 = por %p124, %p125
    %p128 = scmp.ne.s32.totalorder %s113, %s127
    %p129 = scmp.eq.s32.totalorder %s30, 0
    %p130 = por %p128, %p129
    %s132 = sadd.s32 %s131, 1
    %p135 = scmp.eq.s32.totalorder %s24, 1
    %p136 = scmp.ne.s32.totalorder %s131, %s133
    %p137 = scmp.eq.s32.totalorder %s24, 0
    %p138 = por %p136, %p137
    %p139 = scmp.ne.s32.totalorder %s131, %s133
    %p140 = scmp.eq.s32.totalorder %s29, 1
    %p141 = por %p139, %p140
    %p142 = scmp.ne.s32.totalorder %s133, %s134
    %p143 = scmp.eq.s32.totalorder %s29, 0
    %p144 = por %p142, %p143
    %p145 = scmp.ne.s32.totalorder %s133, %s134
    %p146 = scmp.eq.s32.totalorder %s30, 1
    %p147 = por %p145, %p146
    %p149 = scmp.ne.s32.totalorder %s134, %s148
    %p150 = scmp.eq.s32.totalorder %s30, 0
    %p151 = por %p149, %p150
    %s153 = sadd.s32 %s152, 1
    %p156 = scmp.eq.s32.totalorder %s24, 1
    %p157 = scmp.ne.s32.totalorder %s152, %s154
    %p158 = scmp.eq.s32.totalorder %s24, 0
    %p159 = por %p157, %p158
    %p160 = scmp.ne.s32.totalorder %s152, %s154
    %p161 = scmp.eq.s32.totalorder %s29, 1
    %p162 = por %p160, %p161
    %p163 = scmp.ne.s32.totalorder %s154, %s155
    %p164 = scmp.eq.s32.totalorder %s29, 0
    %p165 = por %p163, %p164
    %p166 = scmp.ne.s32.totalorder %s154, %s155
    %p167 = scmp.eq.s32.totalorder %s30, 1
    %p168 = por %p166, %p167
    %p170 = scmp.ne.s32.totalorder %s155, %s169
    %p171 = scmp.eq.s32.totalorder %s30, 0
    %p172 = por %p170, %p171
    %s174 = sadd.s32 %s173, 1
    %p177 = scmp.eq.s32.totalorder %s24, 1
    %p178 = scmp.ne.s32.totalorder %s173, %s175
    %p179 = scmp.eq.s32.totalorder %s24, 0
    %p180 = por %p178, %p179
    %p181 = scmp.ne.s32.totalorder %s173, %s175
    %p182 = scmp.eq.s32.totalorder %s29, 1
    %p183 = por %p181, %p182
    %p184 = scmp.ne.s32.totalorder %s175, %s176
    %p185 = scmp.eq.s32.totalorder %s29, 0
    %p186 = por %p184, %p185
    %p187 = scmp.ne.s32.totalorder %s175, %s176
    %p188 = scmp.eq.s32.totalorder %s30, 1
    %p189 = por %p187, %p188
    %p191 = scmp.ne.s32.totalorder %s176, %s190
    %p192 = scmp.eq.s32.totalorder %s30, 0
    %p193 = por %p191, %p192
    %s195 = sadd.s32 %s194, 1
    %p198 = scmp.eq.s32.totalorder %s24, 1
    %p199 = scmp.ne.s32.totalorder %s194, %s196
    %p200 = scmp.eq.s32.totalorder %s24, 0
    %p201 = por %p199, %p200
    %p202 = scmp.ne.s32.totalorder %s194, %s196
    %p203 = scmp.eq.s32.totalorder %s29, 1
    %p204 = por %p202, %p203
    %p205 = scmp.ne.s32.totalorder %s196, %s197
    %p206 = scmp.eq.s32.totalorder %s29, 0
    %p207 = por %p205, %p206
    %p208 = scmp.ne.s32.totalorder %s196, %s197
    %p209 = scmp.eq.s32.totalorder %s30, 1
    %p210 = por %p208, %p209
    %p212 = scmp.ne.s32.totalorder %s197, %s211
    %p213 = scmp.eq.s32.totalorder %s30, 0
    %p214 = por %p212, %p213
    %s216 = sadd.s32 %s215, 1
    %p219 = scmp.eq.s32.totalorder %s24, 1
    %p220 = scmp.ne.s32.totalorder %s215, %s217
    %p221 = scmp.eq.s32.totalorder %s24, 0
    %p222 = por %p220, %p221
    %p223 = scmp.ne.s32.totalorder %s215, %s217
    %p224 = scmp.eq.s32.totalorder %s29, 1
    %p225 = por %p223, %p224
    %p226 = scmp.ne.s32.totalorder %s217, %s218
    %p227 = scmp.eq.s32.totalorder %s29, 0
    %p228 = por %p226, %p227
    %p229 = scmp.ne.s32.totalorder %s217, %s218
    %p230 = scmp.eq.s32.totalorder %s30, 1
    %p231 = por %p229, %p230
    %p233 = scmp.ne.s32.totalorder %s218, %s232
    %p234 = scmp.eq.s32.totalorder %s30, 0
    %p235 = por %p233, %p234
    %s237 = sadd.s32 %s236, 1
    %p240 = scmp.eq.s32.totalorder %s24, 1
    %p241 = scmp.ne.s32.totalorder %s236, %s238
    %p242 = scmp.eq.s32.totalorder %s24, 0
    %p243 = por %p241, %p242
    %p244 = scmp.ne.s32.totalorder %s236, %s238
    %p245 = scmp.eq.s32.totalorder %s29, 1
    %p246 = por %p244, %p245
    %p247 = scmp.ne.s32.totalorder %s238, %s239
    %p248 = scmp.eq.s32.totalorder %s29, 0
    %p249 = por %p247, %p248
    %p250 = scmp.ne.s32.totalorder %s238, %s239
    %p251 = scmp.eq.s32.totalorder %s30, 1
    %p252 = por %p250, %p251
    %p254 = scmp.ne.s32.totalorder %s239, %s253
    %p255 = scmp.eq.s32.totalorder %s30, 0
    %p256 = por %p254, %p255
    %s258 = sadd.s32 %s257, 1
    %p261 = scmp.eq.s32.totalorder %s24, 1
    %p262 = scmp.ne.s32.totalorder %s257, %s259
    %p263 = scmp.eq.s32.totalorder %s24, 0
    %p264 = por %p262, %p263
    %p265 = scmp.ne.s32.totalorder %s257, %s259
    %p266 = scmp.eq.s32.totalorder %s29, 1
    %p267 = por %p265, %p266
    %p268 = scmp.ne.s32.totalorder %s259, %s260
    %p269 = scmp.eq.s32.totalorder %s29, 0
    %p270 = por %p268, %p269
    %p271 = scmp.ne.s32.totalorder %s259, %s260
    %p272 = scmp.eq.s32.totalorder %s30, 1
    %p273 = por %p271, %p272
    %p275 = scmp.ne.s32.totalorder %s260, %s274
    %p276 = scmp.eq.s32.totalorder %s30, 0
    %p277 = por %p275, %p276
    %s279 = sadd.s32 %s278, 1
    %p282 = scmp.eq.s32.totalorder %s24, 1
    %p283 = scmp.ne.s32.totalorder %s278, %s280
    %p284 = scmp.eq.s32.totalorder %s24, 0
    %p285 = por %p283, %p284
    %p286 = scmp.ne.s32.totalorder %s278, %s280
    %p287 = scmp.eq.s32.totalorder %s29, 1
    %p288 = por %p286, %p287
    %p289 = scmp.ne.s32.totalorder %s280, %s281
    %p290 = scmp.eq.s32.totalorder %s29, 0
    %p291 = por %p289, %p290
    %p292 = scmp.ne.s32.totalorder %s280, %s281
    %p293 = scmp.eq.s32.totalorder %s30, 1
    %p294 = por %p292, %p293
    %p296 = scmp.ne.s32.totalorder %s281, %s295
    %p297 = scmp.eq.s32.totalorder %s30, 0
    %p298 = por %p296, %p297
    %s300 = sadd.s32 %s299, 1
    %p303 = scmp.eq.s32.totalorder %s24, 1
    %p304 = scmp.ne.s32.totalorder %s299, %s301
    %p305 = scmp.eq.s32.totalorder %s24, 0
    %p306 = por %p304, %p305
    %p307 = scmp.ne.s32.totalorder %s299, %s301
    %p308 = scmp.eq.s32.totalorder %s29, 1
    %p309 = por %p307, %p308
    %p310 = scmp.ne.s32.totalorder %s301, %s302
    %p311 = scmp.eq.s32.totalorder %s29, 0
    %p312 = por %p310, %p311
    %p313 = scmp.ne.s32.totalorder %s301, %s302
    %p314 = scmp.eq.s32.totalorder %s30, 1
    %p315 = por %p313, %p314
    %p317 = scmp.ne.s32.totalorder %s302, %s316
    %p318 = scmp.eq.s32.totalorder %s30, 0
    %p319 = por %p317, %p318
    %s321 = sadd.s32 %s320, 1
    %p324 = scmp.eq.s32.totalorder %s24, 1
    %p325 = scmp.ne.s32.totalorder %s320, %s322
    %p326 = scmp.eq.s32.totalorder %s24, 0
    %p327 = por %p325, %p326
    %p328 = scmp.ne.s32.totalorder %s320, %s322
    %p329 = scmp.eq.s32.totalorder %s29, 1
    %p330 = por %p328, %p329
    %p331 = scmp.ne.s32.totalorder %s322, %s323
    %p332 = scmp.eq.s32.totalorder %s29, 0
    %p333 = por %p331, %p332
    %p334 = scmp.ne.s32.totalorder %s322, %s323
    %p335 = scmp.eq.s32.totalorder %s30, 1
    %p336 = por %p334, %p335
    %p338 = scmp.ne.s32.totalorder %s323, %s337
    %p339 = scmp.eq.s32.totalorder %s30, 0
    %p340 = por %p338, %p339
    %s342 = sadd.s32 %s341, 1
    %p345 = scmp.eq.s32.totalorder %s24, 1
    %p346 = scmp.ne.s32.totalorder %s341, %s343
    %p347 = scmp.eq.s32.totalorder %s24, 0
    %p348 = por %p346, %p347
    %p349 = scmp.ne.s32.totalorder %s341, %s343
    %p350 = scmp.eq.s32.totalorder %s29, 1
    %p351 = por %p349, %p350
    %p352 = scmp.ne.s32.totalorder %s343, %s344
    %p353 = scmp.eq.s32.totalorder %s29, 0
    %p354 = por %p352, %p353
    %p355 = scmp.ne.s32.totalorder %s343, %s344
    %p356 = scmp.eq.s32.totalorder %s30, 1
    %p357 = por %p355, %p356
    %p359 = scmp.ne.s32.totalorder %s344, %s358
    %p360 = scmp.eq.s32.totalorder %s30, 0
    %p361 = por %p359, %p360
    %s363 = sadd.s32 %s362, 1
    %p366 = scmp.eq.s32.totalorder %s24, 1
    %p367 = scmp.ne.s32.totalorder %s362, %s364
    %p368 = scmp.eq.s32.totalorder %s24, 0
    %p369 = por %p367, %p368
    %p370 = scmp.ne.s32.totalorder %s362, %s364
    %p371 = scmp.eq.s32.totalorder %s29, 1
    %p372 = por %p370, %p371
    %p373 = scmp.ne.s32.totalorder %s364, %s365
    %p374 = scmp.eq.s32.totalorder %s29, 0
    %p375 = por %p373, %p374
    %p376 = scmp.ne.s32.totalorder %s364, %s365
    %p377 = scmp.eq.s32.totalorder %s30, 1
    %p378 = por %p376, %p377
    %p380 = scmp.ne.s32.totalorder %s365, %s379
    %p381 = scmp.eq.s32.totalorder %s30, 0
    %p382 = por %p380, %p381
    %s383 = ssub.s32 %s24, %s31
    %p384 = scmp.eq.s32.totalorder %s383, 0
    %s386 = sadd.s32 %s385, 1
    %s387 = scalar_select %p384, %s385, %s386
    %p390 = pneg %p384
    %p391 = scmp.eq.s32.totalorder %s24, 1
    %p392 = por %p390, %p391
    %p393 = scmp.ne.s32.totalorder %s385, %s388
    %p394 = scmp.eq.s32.totalorder %s24, 0
    %p395 = por %p393, %p394
    %p396 = scmp.ne.s32.totalorder %s385, %s388
    %p397 = scmp.eq.s32.totalorder %s29, 1
    %p398 = por %p396, %p397
    %p399 = scmp.ne.s32.totalorder %s388, %s389
    %p400 = scmp.eq.s32.totalorder %s29, 0
    %p401 = por %p399, %p400
    %p402 = scmp.ne.s32.totalorder %s388, %s389
    %p403 = scmp.eq.s32.totalorder %s30, 1
    %p404 = por %p402, %p403
    %p406 = scmp.ne.s32.totalorder %s389, %s405
    %p407 = scmp.eq.s32.totalorder %s30, 0
    %p408 = por %p406, %p407
    %s409 = ssub.s32 %s24, %s31
    %p410 = scmp.eq.s32.totalorder %s409, 0
    %s412 = sadd.s32 %s411, 1
    %s413 = scalar_select %p410, %s411, %s412
    %p416 = pneg %p410
    %p417 = scmp.eq.s32.totalorder %s24, 1
    %p418 = por %p416, %p417
    %p419 = scmp.ne.s32.totalorder %s411, %s414
    %p420 = scmp.eq.s32.totalorder %s24, 0
    %p421 = por %p419, %p420
    %p422 = scmp.ne.s32.totalorder %s411, %s414
    %p423 = scmp.eq.s32.totalorder %s29, 1
    %p424 = por %p422, %p423
    %p425 = scmp.ne.s32.totalorder %s414, %s415
    %p426 = scmp.eq.s32.totalorder %s29, 0
    %p427 = por %p425, %p426
    %p428 = scmp.ne.s32.totalorder %s414, %s415
    %p429 = scmp.eq.s32.totalorder %s30, 1
    %p430 = por %p428, %p429
    %p432 = scmp.ne.s32.totalorder %s415, %s431
    %p433 = scmp.eq.s32.totalorder %s30, 0
    %p434 = por %p432, %p433
    %p435 = scmp.le.s32.totalorder 1, %s24
    %p436 = scmp.lt.s32.totalorder %s24, 3
    %p437 = pnand %p435, %p436
    %p438 = pneg %p437
    // Predicated region
    $region9: #{tpu_custom_call.1} parent=5 // pred_check
      _
    $region10: #{tpu_custom_call.1} parent=5 // pred_check_branch
      %440 = sbr.rel (%p437) target = $region12
    $region11: #{tpu_custom_call.1} parent=5 // pred_region
      %s441 = ssub.s32 %s24, 1
      // Predicated region
      $region13: #{tpu_custom_call.1} parent=11 // pred_check
        %p442 = pneg %p123
      $region14: #{tpu_custom_call.1} parent=11 // pred_check_branch
        %444 = sbr.rel (%p442) target = $region16
      $region15: #{tpu_custom_call.1} parent=11 // pred_region
        _
      $region16: #{tpu_custom_call.1} parent=11 // pred_fallthru
        _
      // Predicated region
      $region17: #{tpu_custom_call.1} parent=11 // pred_check
        %p445 = pneg %p144
      $region18: #{tpu_custom_call.1} parent=11 // pred_check_branch
        %447 = sbr.rel (%p445) target = $region20
      $region19: #{tpu_custom_call.1} parent=11 // pred_region
        _
      $region20: #{tpu_custom_call.1} parent=11 // pred_fallthru
        _
      // Predicated region
      $region21: #{tpu_custom_call.1} parent=11 // pred_check
        %p448 = pneg %p165
      $region22: #{tpu_custom_call.1} parent=11 // pred_check_branch
        %450 = sbr.rel (%p448) target = $region24
      $region23: #{tpu_custom_call.1} parent=11 // pred_region
        _
      $region24: #{tpu_custom_call.1} parent=11 // pred_fallthru
        _
      // Predicated region
      $region25: #{tpu_custom_call.1} parent=11 // pred_check
        %p451 = pneg %p186
      $region26: #{tpu_custom_call.1} parent=11 // pred_check_branch
        %453 = sbr.rel (%p451) target = $region28
      $region27: #{tpu_custom_call.1} parent=11 // pred_region
        _
      $region28: #{tpu_custom_call.1} parent=11 // pred_fallthru
        _
      // Predicated region
      $region29: #{tpu_custom_call.1} parent=11 // pred_check
        %p454 = pneg %p207
      $region30: #{tpu_custom_call.1} parent=11 // pred_check_branch
        %456 = sbr.rel (%p454) target = $region32
      $region31: #{tpu_custom_call.1} parent=11 // pred_region
        _
      $region32: #{tpu_custom_call.1} parent=11 // pred_fallthru
        _
      // Predicated region
      $region33: #{tpu_custom_call.1} parent=11 // pred_check
        %p457 = pneg %p228
      $region34: #{tpu_custom_call.1} parent=11 // pred_check_branch
        %459 = sbr.rel (%p457) target = $region36
      $region35: #{tpu_custom_call.1} parent=11 // pred_region
        _
      $region36: #{tpu_custom_call.1} parent=11 // pred_fallthru
        _
      // Predicated region
      $region37: #{tpu_custom_call.1} parent=11 // pred_check
        %p460 = pneg %p249
      $region38: #{tpu_custom_call.1} parent=11 // pred_check_branch
        %462 = sbr.rel (%p460) target = $region40
      $region39: #{tpu_custom_call.1} parent=11 // pred_region
        _
      $region40: #{tpu_custom_call.1} parent=11 // pred_fallthru
        _
      // Predicated region
      $region41: #{tpu_custom_call.1} parent=11 // pred_check
        %p463 = pneg %p270
      $region42: #{tpu_custom_call.1} parent=11 // pred_check_branch
        %465 = sbr.rel (%p463) target = $region44
      $region43: #{tpu_custom_call.1} parent=11 // pred_region
        _
      $region44: #{tpu_custom_call.1} parent=11 // pred_fallthru
        _
      // Predicated region
      $region45: #{tpu_custom_call.1} parent=11 // pred_check
        %p466 = pneg %p291
      $region46: #{tpu_custom_call.1} parent=11 // pred_check_branch
        %468 = sbr.rel (%p466) target = $region48
      $region47: #{tpu_custom_call.1} parent=11 // pred_region
        _
      $region48: #{tpu_custom_call.1} parent=11 // pred_fallthru
        _
      // Predicated region
      $region49: #{tpu_custom_call.1} parent=11 // pred_check
        %p469 = pneg %p312
      $region50: #{tpu_custom_call.1} parent=11 // pred_check_branch
        %471 = sbr.rel (%p469) target = $region52
      $region51: #{tpu_custom_call.1} parent=11 // pred_region
        _
      $region52: #{tpu_custom_call.1} parent=11 // pred_fallthru
        _
      // Predicated region
      $region53: #{tpu_custom_call.1} parent=11 // pred_check
        %p472 = pneg %p333
      $region54: #{tpu_custom_call.1} parent=11 // pred_check_branch
        %474 = sbr.rel (%p472) target = $region56
      $region55: #{tpu_custom_call.1} parent=11 // pred_region
        _
      $region56: #{tpu_custom_call.1} parent=11 // pred_fallthru
        _
      // Predicated region
      $region57: #{tpu_custom_call.1} parent=11 // pred_check
        %p475 = pneg %p354
      $region58: #{tpu_custom_call.1} parent=11 // pred_check_branch
        %477 = sbr.rel (%p475) target = $region60
      $region59: #{tpu_custom_call.1} parent=11 // pred_region
        _
      $region60: #{tpu_custom_call.1} parent=11 // pred_fallthru
        _
      // Predicated region
      $region61: #{tpu_custom_call.1} parent=11 // pred_check
        %p478 = pneg %p375
      $region62: #{tpu_custom_call.1} parent=11 // pred_check_branch
        %480 = sbr.rel (%p478) target = $region64
      $region63: #{tpu_custom_call.1} parent=11 // pred_region
        _
      $region64: #{tpu_custom_call.1} parent=11 // pred_fallthru
        _
    $region12: #{tpu_custom_call.1} parent=5 // pred_fallthru
      _
    %p481 = scmp.lt.s32.totalorder %s24, 2
    // Predicated region
    $region65: #{tpu_custom_call.1} parent=5 // pred_check
      %p482 = pneg %p481
    $region66: #{tpu_custom_call.1} parent=5 // pred_check_branch
      %484 = sbr.rel (%p482) target = $region68
    $region67: #{tpu_custom_call.1} parent=5 // pred_region
      // Predicated region
      $region69: #{tpu_custom_call.1} parent=67 // pred_check
        %p485 = pneg %p44
      $region70: #{tpu_custom_call.1} parent=67 // pred_check_branch
        %487 = sbr.rel (%p485) target = $region72
      $region71: #{tpu_custom_call.1} parent=67 // pred_region
        %s488 = smul.u32 16, %s24
        %p489 = scmp.lt.s32.totalorder %s488, 31
        %s490 = scalar_select %p489, %s488, 31
        %s491 = smul.addr %s490, 8
        %s492 = scalar_lea.vmem %s0, %s491
        %s493 = smul.u32 16, %s24
      $region72: #{tpu_custom_call.1} parent=67 // pred_fallthru
        _
      // Predicated region
      $region73: #{tpu_custom_call.1} parent=67 // pred_check
        %p494 = pneg %p70
      $region74: #{tpu_custom_call.1} parent=67 // pred_check_branch
        %496 = sbr.rel (%p494) target = $region76
      $region75: #{tpu_custom_call.1} parent=67 // pred_region
        %s497 = smul.u32 16, %s24
        %p498 = scmp.lt.s32.totalorder %s497, 31
        %s499 = scalar_select %p498, %s497, 31
        %s500 = smul.addr %s499, 8
        %s501 = scalar_lea.vmem %s1, %s500
        %s502 = smul.u32 16, %s24
      $region76: #{tpu_custom_call.1} parent=67 // pred_fallthru
        _
      // Predicated region
      $region77: #{tpu_custom_call.1} parent=67 // pred_check
        %p503 = pneg %p96
      $region78: #{tpu_custom_call.1} parent=67 // pred_check_branch
        %505 = sbr.rel (%p503) target = $region80
      $region79: #{tpu_custom_call.1} parent=67 // pred_region
        %s506 = smul.u32 16, %s24
        %p507 = scmp.lt.s32.totalorder %s506, 31
        %s508 = scalar_select %p507, %s506, 31
        %s509 = smul.addr %s508, 8
        %s510 = scalar_lea.vmem %s2, %s509
        %s511 = smul.u32 16, %s24
      $region80: #{tpu_custom_call.1} parent=67 // pred_fallthru
        _
    $region68: #{tpu_custom_call.1} parent=5 // pred_fallthru
      _
    %p512 = scmp.le.s32.totalorder 1, %s24
    %p513 = scmp.lt.s32.totalorder %s24, 3
    %p514 = pnand %p512, %p513
    %p515 = pneg %p514
    // Predicated region
    $region81: #{tpu_custom_call.1} parent=5 // pred_check
      _
    $region82: #{tpu_custom_call.1} parent=5 // pred_check_branch
      %517 = sbr.rel (%p514) target = $region84
    $region83: #{tpu_custom_call.1} parent=5 // pred_region
      %s518 = ssub.s32 %s24, 1
      %s519 = smul.u32 16, %s29
      %p520 = scmp.lt.s32.totalorder %s519, 31
      %s521 = scalar_select %p520, %s519, 31
      %s522 = smul.addr %s521, 8
      %s523 = scalar_lea.vmem %s0, %s522
      %p524 = pneg %p50
      %p525 = pneg %p47
      %s526 = smul.u32 16, %s29
      %p527 = scmp.lt.s32.totalorder %s526, 31
      %s528 = scalar_select %p527, %s526, 31
      %s529 = smul.addr %s528, 8
      %s530 = scalar_lea.vmem %s1, %s529
      %p531 = pneg %p76
      %p532 = pneg %p73
      %s533 = smul.u32 16, %s29
      %p534 = scmp.lt.s32.totalorder %s533, 31
      %s535 = scalar_select %p534, %s533, 31
      %s536 = smul.addr %s535, 8
      %s537 = scalar_lea.vmem %s2, %s536
      %p538 = pneg %p102
      %p539 = pneg %p99
      %p540 = pneg %p123
      %p541 = pneg %p120
      %p542 = pneg %p144
      %p543 = pneg %p141
      %p544 = pneg %p165
      %p545 = pneg %p162
      %p546 = pneg %p186
      %p547 = pneg %p183
      %p548 = pneg %p207
      %p549 = pneg %p204
      %p550 = pneg %p228
      %p551 = pneg %p225
      %p552 = pneg %p249
      %p553 = pneg %p246
      %p554 = pneg %p270
      %p555 = pneg %p267
      %p556 = pneg %p291
      %p557 = pneg %p288
      %p558 = pneg %p312
      %p559 = pneg %p309
      %p560 = pneg %p333
      %p561 = pneg %p330
      %p562 = pneg %p354
      %p563 = pneg %p351
      %p564 = pneg %p375
      %p565 = pneg %p372
      %p566 = pneg %p401
      %p567 = pneg %p398
      %s568 = smul.u32 16, %s29
      %p569 = scmp.lt.s32.totalorder %s568, 31
      %s570 = scalar_select %p569, %s568, 31
      %s571 = smul.addr %s570, 8
      %s572 = scalar_lea.vmem %s16, %s571
      %p573 = pneg %p427
      %p574 = pneg %p424
      %s575 = smul.u32 16, %s29
      %p576 = scmp.lt.s32.totalorder %s575, 31
      %s577 = scalar_select %p576, %s575, 31
      %s578 = smul.addr %s577, 8
      %s579 = scalar_lea.vmem %s17, %s578
      %s580 = smul.u32 16, %s29
      %p581 = scmp.lt.s32.totalorder %s580, 31
      %s582 = scalar_select %p581, %s580, 31
      %s583 = smul.addr %s582, 8
      %s584 = scalar_lea.vmem %s0, %s583
      %s585 = smul.u32 16, %s29
      %s586 = smul.u32 16, %s29
      %p587 = scmp.lt.s32.totalorder %s586, 31
      %s588 = scalar_select %p587, %s586, 31
      %s589 = smul.addr %s588, 8
      %s590 = scalar_lea.vmem %s1, %s589
      %s591 = smul.u32 16, %s29
      %s592 = smul.u32 16, %s29
      %p593 = scmp.lt.s32.totalorder %s592, 31
      %s594 = scalar_select %p593, %s592, 31
      %s595 = smul.addr %s594, 8
      %s596 = scalar_lea.vmem %s2, %s595
      %s597 = smul.u32 16, %s29
      %s598 = smul.u32 16, %s29
      %p599 = scmp.lt.s32.totalorder %s598, 31
      %s600 = scalar_select %p599, %s598, 31
      %s601 = smul.addr %s600, 8
      %s602 = scalar_lea.vmem %s16, %s601
      %s603 = smul.u32 16, %s29
      %s604 = smul.u32 16, %s29
      %p605 = scmp.lt.s32.totalorder %s604, 31
      %s606 = scalar_select %p605, %s604, 31
      %s607 = smul.addr %s606, 8
      %s608 = scalar_lea.vmem %s17, %s607
      %s609 = smul.u32 16, %s29
      %v611 = vld [vmem:[%s590] sm:$0xff]
      %v612 = vld [vmem:[%s590 + $0x8] sm:$0xff]
      %v613 = vld [vmem:[%s590 + $0x10] sm:$0xff]
      %v614 = vld [vmem:[%s590 + $0x18] sm:$0xff]
      %v615 = vld [vmem:[%s590 + $0x20] sm:$0xff]
      %v616 = vld [vmem:[%s590 + $0x28] sm:$0xff]
      %v617 = vld [vmem:[%s590 + $0x30] sm:$0xff]
      %v618 = vld [vmem:[%s590 + $0x38] sm:$0xff]
      %v619 = vld [vmem:[%s590 + $0x40] sm:$0xff]
      %v620 = vld [vmem:[%s590 + $0x48] sm:$0xff]
      %v621 = vld [vmem:[%s590 + $0x50] sm:$0xff]
      %v622 = vld [vmem:[%s590 + $0x58] sm:$0xff]
      %v623 = vld [vmem:[%s590 + $0x60] sm:$0xff]
      %v624 = vld [vmem:[%s590 + $0x68] sm:$0xff]
      %v625 = vld [vmem:[%s590 + $0x70] sm:$0xff]
      %v626 = vld [vmem:[%s590 + $0x78] sm:$0xff]
      %v627 = vpack.c.bf16 %v612, %v611
      %v628 = vpack.c.bf16 %v614, %v613
      %v629 = vpack.c.bf16 %v616, %v615
      %v630 = vpack.c.bf16 %v618, %v617
      %v631 = vpack.c.bf16 %v620, %v619
      %v632 = vpack.c.bf16 %v622, %v621
      %v633 = vpack.c.bf16 %v624, %v623
      %v634 = vpack.c.bf16 %v626, %v625
      %v635 = vld [vmem:[%s4] sm:$0x3]
      %vm636 = vcmask 31744
      %v638 = vsel %vm636, %v627, 0
      %v641 = vsel %vm636, %v628, 0
      %v644 = vsel %vm636, %v629, 0
      %v647 = vsel %vm636, %v630, 0
      %v650 = vsel %vm636, %v631, 0
      %v653 = vsel %vm636, %v632, 0
      %v656 = vsel %vm636, %v633, 0
      %v659 = vsel %vm636, %v634, 0
      %vm661 = vcmask 1041408
      %v663 = vsel %vm661, %v635, 0
      %665 = vmatprep.subr.bf16.mxu0 0
      %666 = vmatpush1.bf16.msra.mxu0 %v663
      %667 = vmatprep.subr.bf16.mxu0 0
      %668 = vmatpush1.bf16.msra.mxu0 0
      %669 = vmatprep.subr.bf16.mxu0 0
      %670 = vmatpush1.bf16.msra.mxu0 0
      %671 = vmatprep.subr.bf16.mxu0 0
      %672 = vmatpush1.bf16.msra.mxu0 0
      %673 = vmatprep.subr.bf16.mxu0 0
      %674 = vmatpush1.bf16.msra.mxu0 0
      %675 = vmatprep.subr.bf16.mxu0 0
      %676 = vmatpush1.bf16.msra.mxu0 0
      %677 = vmatprep.subr.bf16.mxu0 0
      %678 = vmatpush1.bf16.msra.mxu0 0
      %679 = vmatprep.subr.bf16.mxu0 0
      %680 = vmatpush1.bf16.msra.mxu0 0
      %681 = vmatprep.subr.bf16.mxu0 0
      %682 = vmatpush1.bf16.msra.mxu0 0
      %683 = vmatprep.subr.bf16.mxu0 0
      %684 = vmatpush1.bf16.msra.mxu0 0
      %685 = vmatprep.subr.bf16.mxu0 0
      %686 = vmatpush1.bf16.msra.mxu0 0
      %687 = vmatprep.subr.bf16.mxu0 0
      %688 = vmatpush1.bf16.msra.mxu0 0
      %689 = vmatprep.subr.bf16.mxu0 0
      %690 = vmatpush1.bf16.msra.mxu0 0
      %691 = vmatprep.subr.bf16.mxu0 0
      %692 = vmatpush1.bf16.msra.mxu0 0
      %693 = vmatprep.subr.bf16.mxu0 0
      %694 = vmatpush1.bf16.msra.mxu0 0
      %695 = vmatprep.subr.bf16.mxu0 0
      %696 = vmatpush1.bf16.msra.mxu0 0
      %697 = vmatprep.mubr.bf16.mxu0 0
      %698 = vmatmul.mubr.bf16.gmra.mrb[0].mxu0 %v638
      %v699 = vpop.f32.mrb[0].mxu0
      %v700 = vadd.f32 0.0, %v699
      %v701 = vpop.f32.mrb[0].mxu0
      %v702 = vpop.f32.mrb[0].mxu0
      %v703 = vadd.f32 0.0, %v702
      %v704 = vpop.f32.mrb[0].mxu0
      %705 = vmatprep.mubr.bf16.mxu0 0
      %706 = vmatmul.mubr.bf16.gmra.mrb[0].mxu0 %v641
      %v707 = vpop.f32.mrb[0].mxu0
      %v708 = vadd.f32 0.0, %v707
      %v709 = vpop.f32.mrb[0].mxu0
      %v710 = vpop.f32.mrb[0].mxu0
      %v711 = vadd.f32 0.0, %v710
      %v712 = vpop.f32.mrb[0].mxu0
      %713 = vmatprep.mubr.bf16.mxu0 0
      %714 = vmatmul.mubr.bf16.gmra.mrb[0].mxu0 %v644
      %v715 = vpop.f32.mrb[0].mxu0
      %v716 = vadd.f32 0.0, %v715
      %v717 = vpop.f32.mrb[0].mxu0
      %v718 = vpop.f32.mrb[0].mxu0
      %v719 = vadd.f32 0.0, %v718
      %v720 = vpop.f32.mrb[0].mxu0
      %721 = vmatprep.mubr.bf16.mxu0 0
      %722 = vmatmul.mubr.bf16.gmra.mrb[0].mxu0 %v647
      %v723 = vpop.f32.mrb[0].mxu0
      %v724 = vadd.f32 0.0, %v723
      %v725 = vpop.f32.mrb[0].mxu0
      %v726 = vpop.f32.mrb[0].mxu0
      %v727 = vadd.f32 0.0, %v726
      %v728 = vpop.f32.mrb[0].mxu0
      %729 = vmatprep.mubr.bf16.mxu0 0
      %730 = vmatmul.mubr.bf16.gmra.mrb[0].mxu0 %v650
      %v731 = vpop.f32.mrb[0].mxu0
      %v732 = vadd.f32 0.0, %v731
      %v733 = vpop.f32.mrb[0].mxu0
      %v734 = vpop.f32.mrb[0].mxu0
      %v735 = vadd.f32 0.0, %v734
      %v736 = vpop.f32.mrb[0].mxu0
      %737 = vmatprep.mubr.bf16.mxu0 0
      %738 = vmatmul.mubr.bf16.gmra.mrb[0].mxu0 %v653
      %v739 = vpop.f32.mrb[0].mxu0
      %v740 = vadd.f32 0.0, %v739
      %v741 = vpop.f32.mrb[0].mxu0
      %v742 = vpop.f32.mrb[0].mxu0
      %v743 = vadd.f32 0.0, %v742
      %v744 = vpop.f32.mrb[0].mxu0
      %745 = vmatprep.mubr.bf16.mxu0 0
      %746 = vmatmul.mubr.bf16.gmra.mrb[0].mxu0 %v656
      %v747 = vpop.f32.mrb[0].mxu0
      %v748 = vadd.f32 0.0, %v747
      %v749 = vpop.f32.mrb[0].mxu0
      %v750 = vpop.f32.mrb[0].mxu0
      %v751 = vadd.f32 0.0, %v750
      %v752 = vpop.f32.mrb[0].mxu0
      %753 = vmatprep.mubr.bf16.mxu0 0
      %754 = vmatmul.mubr.bf16.gmra.mrb[0].mxu0 %v659
      %v755 = vpop.f32.mrb[0].mxu0
      %v756 = vadd.f32 0.0, %v755
      %v757 = vpop.f32.mrb[0].mxu0
      %v758 = vpop.f32.mrb[0].mxu0
      %v759 = vadd.f32 0.0, %v758
      %v760 = vpop.f32.mrb[0].mxu0
      %761 = vdwg.mxu0
      %v762 = vld [vmem:[%s584] sm:$0xff]
      %v763 = vld [vmem:[%s584 + $0x8] sm:$0xff]
      %v764 = vld [vmem:[%s584 + $0x10] sm:$0xff]
      %v765 = vld [vmem:[%s584 + $0x18] sm:$0xff]
      %v766 = vld [vmem:[%s584 + $0x20] sm:$0xff]
      %v767 = vld [vmem:[%s584 + $0x28] sm:$0xff]
      %v768 = vld [vmem:[%s584 + $0x30] sm:$0xff]
      %v769 = vld [vmem:[%s584 + $0x38] sm:$0xff]
      %v770 = vld [vmem:[%s584 + $0x40] sm:$0xff]
      %v771 = vld [vmem:[%s584 + $0x48] sm:$0xff]
      %v772 = vld [vmem:[%s584 + $0x50] sm:$0xff]
      %v773 = vld [vmem:[%s584 + $0x58] sm:$0xff]
      %v774 = vld [vmem:[%s584 + $0x60] sm:$0xff]
      %v775 = vld [vmem:[%s584 + $0x68] sm:$0xff]
      %v776 = vld [vmem:[%s584 + $0x70] sm:$0xff]
      %v777 = vld [vmem:[%s584 + $0x78] sm:$0xff]
      %v778 = vpack.c.bf16 %v763, %v762
      %v779 = vpack.c.bf16 %v765, %v764
      %v780 = vpack.c.bf16 %v767, %v766
      %v781 = vpack.c.bf16 %v769, %v768
      %v782 = vpack.c.bf16 %v771, %v770
      %v783 = vpack.c.bf16 %v773, %v772
      %v784 = vpack.c.bf16 %v775, %v774
      %v785 = vpack.c.bf16 %v777, %v776
      %v786 = vld [vmem:[%s3] sm:$0xf]
      %v787 = vld [vmem:[%s3 + $0x4] sm:$0xf]
      %v790 = vunpack.c.l.b16 %v786
      %v791 = vunpack.c.l.b16 %v787
      %v792 = vpack.c.b16 %v791, %v790
      %vm794 = vcmask 130048
      %v796 = vsel %vm794, %v778, 0
      %v799 = vsel %vm794, %v779, 0
      %v802 = vsel %vm794, %v780, 0
      %v805 = vsel %vm794, %v781, 0
      %v808 = vsel %vm794, %v782, 0
      %v811 = vsel %vm794, %v783, 0
      %v814 = vsel %vm794, %v784, 0
      %v817 = vsel %vm794, %v785, 0
      %819 = vmatprep.subr.bf16.mxu0 0
      %820 = vmatpush1.bf16.msra.mxu0 %v792
      %821 = vmatprep.subr.bf16.mxu0 0
      %822 = vmatpush1.bf16.msra.mxu0 0
      %823 = vmatprep.subr.bf16.mxu0 0
      %824 = vmatpush1.bf16.msra.mxu0 0
      %825 = vmatprep.subr.bf16.mxu0 0
      %826 = vmatpush1.bf16.msra.mxu0 0
      %827 = vmatprep.subr.bf16.mxu0 0
      %828 = vmatpush1.bf16.msra.mxu0 0
      %829 = vmatprep.subr.bf16.mxu0 0
      %830 = vmatpush1.bf16.msra.mxu0 0
      %831 = vmatprep.subr.bf16.mxu0 0
      %832 = vmatpush1.bf16.msra.mxu0 0
      %833 = vmatprep.subr.bf16.mxu0 0
      %834 = vmatpush1.bf16.msra.mxu0 0
      %835 = vmatprep.subr.bf16.mxu0 0
      %836 = vmatpush1.bf16.msra.mxu0 0
      %837 = vmatprep.subr.bf16.mxu0 0
      %838 = vmatpush1.bf16.msra.mxu0 0
      %839 = vmatprep.subr.bf16.mxu0 0
      %840 = vmatpush1.bf16.msra.mxu0 0
      %841 = vmatprep.subr.bf16.mxu0 0
      %842 = vmatpush1.bf16.msra.mxu0 0
      %843 = vmatprep.subr.bf16.mxu0 0
      %844 = vmatpush1.bf16.msra.mxu0 0
      %845 = vmatprep.subr.bf16.mxu0 0
      %846 = vmatpush1.bf16.msra.mxu0 0
      %847 = vmatprep.subr.bf16.mxu0 0
      %848 = vmatpush1.bf16.msra.mxu0 0
      %849 = vmatprep.subr.bf16.mxu0 0
      %850 = vmatpush1.bf16.msra.mxu0 0
      %851 = vmatprep.mubr.bf16.mxu0 0
      %852 = vmatmul.mubr.bf16.gmra.mrb[0].mxu0 %v796
      %v853 = vpop.f32.mrb[0].mxu0
      %v854 = vadd.f32 %v700, %v853
      %v855 = vpop.f32.mrb[0].mxu0
      %v856 = vpop.f32.mrb[0].mxu0
      %v857 = vadd.f32 %v703, %v856
      %v858 = vpop.f32.mrb[0].mxu0
      %859 = vmatprep.mubr.bf16.mxu0 0
      %860 = vmatmul.mubr.bf16.gmra.mrb[0].mxu0 %v799
      %v861 = vpop.f32.mrb[0].mxu0
      %v862 = vadd.f32 %v708, %v861
      %v863 = vpop.f32.mrb[0].mxu0
      %v864 = vpop.f32.mrb[0].mxu0
      %v865 = vadd.f32 %v711, %v864
      %v866 = vpop.f32.mrb[0].mxu0
      %867 = vmatprep.mubr.bf16.mxu0 0
      %868 = vmatmul.mubr.bf16.gmra.mrb[0].mxu0 %v802
      %v869 = vpop.f32.mrb[0].mxu0
      %v870 = vadd.f32 %v716, %v869
      %v871 = vpop.f32.mrb[0].mxu0
      %v872 = vpop.f32.mrb[0].mxu0
      %v873 = vadd.f32 %v719, %v872
      %v874 = vpop.f32.mrb[0].mxu0
      %875 = vmatprep.mubr.bf16.mxu0 0
      %876 = vmatmul.mubr.bf16.gmra.mrb[0].mxu0 %v805
      %v877 = vpop.f32.mrb[0].mxu0
      %v878 = vadd.f32 %v724, %v877
      %v879 = vpop.f32.mrb[0].mxu0
      %v880 = vpop.f32.mrb[0].mxu0
      %v881 = vadd.f32 %v727, %v880
      %v882 = vpop.f32.mrb[0].mxu0
      %883 = vmatprep.mubr.bf16.mxu0 0
      %884 = vmatmul.mubr.bf16.gmra.mrb[0].mxu0 %v808
      %v885 = vpop.f32.mrb[0].mxu0
      %v886 = vadd.f32 %v732, %v885
      %v887 = vpop.f32.mrb[0].mxu0
      %v888 = vpop.f32.mrb[0].mxu0
      %v889 = vadd.f32 %v735, %v888
      %v890 = vpop.f32.mrb[0].mxu0
      %891 = vmatprep.mubr.bf16.mxu0 0
      %892 = vmatmul.mubr.bf16.gmra.mrb[0].mxu0 %v811
      %v893 = vpop.f32.mrb[0].mxu0
      %v894 = vadd.f32 %v740, %v893
      %v895 = vpop.f32.mrb[0].mxu0
      %v896 = vpop.f32.mrb[0].mxu0
      %v897 = vadd.f32 %v743, %v896
      %v898 = vpop.f32.mrb[0].mxu0
      %899 = vmatprep.mubr.bf16.mxu0 0
      %900 = vmatmul.mubr.bf16.gmra.mrb[0].mxu0 %v814
      %v901 = vpop.f32.mrb[0].mxu0
      %v902 = vadd.f32 %v748, %v901
      %v903 = vpop.f32.mrb[0].mxu0
      %v904 = vpop.f32.mrb[0].mxu0
      %v905 = vadd.f32 %v751, %v904
      %v906 = vpop.f32.mrb[0].mxu0
      %907 = vmatprep.mubr.bf16.mxu0 0
      %908 = vmatmul.mubr.bf16.gmra.mrb[0].mxu0 %v817
      %v909 = vpop.f32.mrb[0].mxu0
      %v910 = vadd.f32 %v756, %v909
      %v911 = vpop.f32.mrb[0].mxu0
      %v912 = vpop.f32.mrb[0].mxu0
      %v913 = vadd.f32 %v759, %v912
      %v914 = vpop.f32.mrb[0].mxu0
      %915 = vdwg.mxu0
      %v916 = vld [vmem:[%s10] sm:$0x1]
      %v918 = vlaneseq
      %v919 = vshrl.u32 %v918, 7
      %v920 = vsub.s32 0, %v919
      %v921 = vrot.slane %v916, %v920
      %v923 = vadd.f32 %v854, %v921
      %v924 = vadd.f32 %v857, %v921
      %v925 = vadd.f32 %v862, %v921
      %v926 = vadd.f32 %v865, %v921
      %v927 = vadd.f32 %v870, %v921
      %v928 = vadd.f32 %v873, %v921
      %v929 = vadd.f32 %v878, %v921
      %v930 = vadd.f32 %v881, %v921
      %v931 = vadd.f32 %v886, %v921
      %v932 = vadd.f32 %v889, %v921
      %v933 = vadd.f32 %v894, %v921
      %v934 = vadd.f32 %v897, %v921
      %v935 = vadd.f32 %v902, %v921
      %v936 = vadd.f32 %v905, %v921
      %v937 = vadd.f32 %v910, %v921
      %v938 = vadd.f32 %v913, %v921
      %v939 = vmax.f32 %v923, 0.0
      %v940 = vmax.f32 %v924, 0.0
      %v941 = vmax.f32 %v925, 0.0
      %v942 = vmax.f32 %v926, 0.0
      %v943 = vmax.f32 %v927, 0.0
      %v944 = vmax.f32 %v928, 0.0
      %v945 = vmax.f32 %v929, 0.0
      %v946 = vmax.f32 %v930, 0.0
      %v947 = vmax.f32 %v931, 0.0
      %v948 = vmax.f32 %v932, 0.0
      %v949 = vmax.f32 %v933, 0.0
      %v950 = vmax.f32 %v934, 0.0
      %v951 = vmax.f32 %v935, 0.0
      %v952 = vmax.f32 %v936, 0.0
      %v953 = vmax.f32 %v937, 0.0
      %v954 = vmax.f32 %v938, 0.0
      %v955 = vpack.c.bf16 %v940, %v939
      %v956 = vpack.c.bf16 %v942, %v941
      %v957 = vpack.c.bf16 %v944, %v943
      %v958 = vpack.c.bf16 %v946, %v945
      %v959 = vpack.c.bf16 %v948, %v947
      %v960 = vpack.c.bf16 %v950, %v949
      %v961 = vpack.c.bf16 %v952, %v951
      %v962 = vpack.c.bf16 %v954, %v953
      %v963 = vld [vmem:[%s5] sm:$0xf]
      %v964 = vld [vmem:[%s5 + $0x4] sm:$0xf]
      %v965 = vld [vmem:[%s5 + $0x8] sm:$0xf]
      %v966 = vld [vmem:[%s5 + $0xc] sm:$0xf]
      %v967 = vld [vmem:[%s11] sm:$0x1]
      %v969 = vlaneseq
      %v970 = vshrl.u32 %v969, 7
      %v971 = vsub.s32 0, %v970
      %v972 = vrot.slane %v967, %v971
      %v978 = vunpack.c.l.b16 %v963
      %v979 = vunpack.c.l.b16 %v964
      %v980 = vunpack.c.l.b16 %v965
      %v981 = vunpack.c.l.b16 %v966
      %v982 = vpack.c.b16 %v979, %v978
      %v983 = vpack.c.b16 %v981, %v980
      %vm986 = vcmask 261120
      %v988 = vsel %vm986, %v955, 0
      %v991 = vsel %vm986, %v956, 0
      %v994 = vsel %vm986, %v957, 0
      %v997 = vsel %vm986, %v958, 0
      %v1000 = vsel %vm986, %v959, 0
      %v1003 = vsel %vm986, %v960, 0
      %v1006 = vsel %vm986, %v961, 0
      %v1009 = vsel %vm986, %v962, 0
      %1011 = vmatprep.subr.bf16.mxu0 0
      %1012 = vmatpush1.bf16.msra.mxu0 %v982
      %1013 = vmatprep.subr.bf16.mxu0 0
      %1014 = vmatpush1.bf16.msra.mxu0 %v983
      %1015 = vmatprep.subr.bf16.mxu0 0
      %1016 = vmatpush1.bf16.msra.mxu0 0
      %1017 = vmatprep.subr.bf16.mxu0 0
      %1018 = vmatpush1.bf16.msra.mxu0 0
      %1019 = vmatprep.subr.bf16.mxu0 0
      %1020 = vmatpush1.bf16.msra.mxu0 0
      %1021 = vmatprep.subr.bf16.mxu0 0
      %1022 = vmatpush1.bf16.msra.mxu0 0
      %1023 = vmatprep.subr.bf16.mxu0 0
      %1024 = vmatpush1.bf16.msra.mxu0 0
      %1025 = vmatprep.subr.bf16.mxu0 0
      %1026 = vmatpush1.bf16.msra.mxu0 0
      %1027 = vmatprep.subr.bf16.mxu0 0
      %1028 = vmatpush1.bf16.msra.mxu0 0
      %1029 = vmatprep.subr.bf16.mxu0 0
      %1030 = vmatpush1.bf16.msra.mxu0 0
      %1031 = vmatprep.subr.bf16.mxu0 0
      %1032 = vmatpush1.bf16.msra.mxu0 0
      %1033 = vmatprep.subr.bf16.mxu0 0
      %1034 = vmatpush1.bf16.msra.mxu0 0
      %1035 = vmatprep.subr.bf16.mxu0 0
      %1036 = vmatpush1.bf16.msra.mxu0 0
      %1037 = vmatprep.subr.bf16.mxu0 0
      %1038 = vmatpush1.bf16.msra.mxu0 0
      %1039 = vmatprep.subr.bf16.mxu0 0
      %1040 = vmatpush1.bf16.msra.mxu0 0
      %1041 = vmatprep.subr.bf16.mxu0 0
      %1042 = vmatpush1.bf16.msra.mxu0 0
      %1043 = vmatprep.mubr.bf16.mxu0 0
      %1044 = vmatmul.mubr.bf16.gmra.mrb[0].mxu0 %v988
      %v1045 = vpop.f32.mrb[0].mxu0
      %v1046 = vadd.f32 %v972, %v1045
      %v1047 = vpop.f32.mrb[0].mxu0
      %v1048 = vpop.f32.mrb[0].mxu0
      %v1049 = vadd.f32 %v972, %v1048
      %v1050 = vpop.f32.mrb[0].mxu0
      %1051 = vmatprep.mubr.bf16.mxu0 0
      %1052 = vmatmul.mubr.bf16.gmra.mrb[0].mxu0 %v991
      %v1053 = vpop.f32.mrb[0].mxu0
      %v1054 = vadd.f32 %v972, %v1053
      %v1055 = vpop.f32.mrb[0].mxu0
      %v1056 = vpop.f32.mrb[0].mxu0
      %v1057 = vadd.f32 %v972, %v1056
      %v1058 = vpop.f32.mrb[0].mxu0
      %1059 = vmatprep.mubr.bf16.mxu0 0
      %1060 = vmatmul.mubr.bf16.gmra.mrb[0].mxu0 %v994
      %v1061 = vpop.f32.mrb[0].mxu0
      %v1062 = vadd.f32 %v972, %v1061
      %v1063 = vpop.f32.mrb[0].mxu0
      %v1064 = vpop.f32.mrb[0].mxu0
      %v1065 = vadd.f32 %v972, %v1064
      %v1066 = vpop.f32.mrb[0].mxu0
      %1067 = vmatprep.mubr.bf16.mxu0 0
      %1068 = vmatmul.mubr.bf16.gmra.mrb[0].mxu0 %v997
      %v1069 = vpop.f32.mrb[0].mxu0
      %v1070 = vadd.f32 %v972, %v1069
      %v1071 = vpop.f32.mrb[0].mxu0
      %v1072 = vpop.f32.mrb[0].mxu0
      %v1073 = vadd.f32 %v972, %v1072
      %v1074 = vpop.f32.mrb[0].mxu0
      %1075 = vmatprep.mubr.bf16.mxu0 0
      %1076 = vmatmul.mubr.bf16.gmra.mrb[0].mxu0 %v1000
      %v1077 = vpop.f32.mrb[0].mxu0
      %v1078 = vadd.f32 %v972, %v1077
      %v1079 = vpop.f32.mrb[0].mxu0
      %v1080 = vpop.f32.mrb[0].mxu0
      %v1081 = vadd.f32 %v972, %v1080
      %v1082 = vpop.f32.mrb[0].mxu0
      %1083 = vmatprep.mubr.bf16.mxu0 0
      %1084 = vmatmul.mubr.bf16.gmra.mrb[0].mxu0 %v1003
      %v1085 = vpop.f32.mrb[0].mxu0
      %v1086 = vadd.f32 %v972, %v1085
      %v1087 = vpop.f32.mrb[0].mxu0
      %v1088 = vpop.f32.mrb[0].mxu0
      %v1089 = vadd.f32 %v972, %v1088
      %v1090 = vpop.f32.mrb[0].mxu0
      %1091 = vmatprep.mubr.bf16.mxu0 0
      %1092 = vmatmul.mubr.bf16.gmra.mrb[0].mxu0 %v1006
      %v1093 = vpop.f32.mrb[0].mxu0
      %v1094 = vadd.f32 %v972, %v1093
      %v1095 = vpop.f32.mrb[0].mxu0
      %v1096 = vpop.f32.mrb[0].mxu0
      %v1097 = vadd.f32 %v972, %v1096
      %v1098 = vpop.f32.mrb[0].mxu0
      %1099 = vmatprep.mubr.bf16.mxu0 0
      %1100 = vmatmul.mubr.bf16.gmra.mrb[0].mxu0 %v1009
      %v1101 = vpop.f32.mrb[0].mxu0
      %v1102 = vadd.f32 %v972, %v1101
      %v1103 = vpop.f32.mrb[0].mxu0
      %v1104 = vpop.f32.mrb[0].mxu0
      %v1105 = vadd.f32 %v972, %v1104
      %v1106 = vpop.f32.mrb[0].mxu0
      %1107 = vdwg.mxu0
      %v1108 = vmax.f32 %v1046, 0.0
      %v1109 = vmax.f32 %v1049, 0.0
      %v1110 = vmax.f32 %v1054, 0.0
      %v1111 = vmax.f32 %v1057, 0.0
      %v1112 = vmax.f32 %v1062, 0.0
      %v1113 = vmax.f32 %v1065, 0.0
      %v1114 = vmax.f32 %v1070, 0.0
      %v1115 = vmax.f32 %v1073, 0.0
      %v1116 = vmax.f32 %v1078, 0.0
      %v1117 = vmax.f32 %v1081, 0.0
      %v1118 = vmax.f32 %v1086, 0.0
      %v1119 = vmax.f32 %v1089, 0.0
      %v1120 = vmax.f32 %v1094, 0.0
      %v1121 = vmax.f32 %v1097, 0.0
      %v1122 = vmax.f32 %v1102, 0.0
      %v1123 = vmax.f32 %v1105, 0.0
      %v1124 = vpack.c.bf16 %v1109, %v1108
      %v1125 = vpack.c.bf16 %v1111, %v1110
      %v1126 = vpack.c.bf16 %v1113, %v1112
      %v1127 = vpack.c.bf16 %v1115, %v1114
      %v1128 = vpack.c.bf16 %v1117, %v1116
      %v1129 = vpack.c.bf16 %v1119, %v1118
      %v1130 = vpack.c.bf16 %v1121, %v1120
      %v1131 = vpack.c.bf16 %v1123, %v1122
      %v1132 = vld [vmem:[%s6] sm:$0xf]
      %v1133 = vld [vmem:[%s6 + $0x4] sm:$0xf]
      %v1134 = vld [vmem:[%s6 + $0x8] sm:$0xf]
      %v1135 = vld [vmem:[%s6 + $0xc] sm:$0xf]
      %v1136 = vld [vmem:[%s12] sm:$0x1]
      %v1138 = vlaneseq
      %v1139 = vshrl.u32 %v1138, 7
      %v1140 = vsub.s32 0, %v1139
      %v1141 = vrot.slane %v1136, %v1140
      %v1147 = vunpack.c.l.b16 %v1132
      %v1148 = vunpack.c.l.b16 %v1133
      %v1149 = vunpack.c.l.b16 %v1134
      %v1150 = vunpack.c.l.b16 %v1135
      %v1151 = vpack.c.b16 %v1148, %v1147
      %v1152 = vpack.c.b16 %v1150, %v1149
      %v1156 = vsel %vm986, %v1124, 0
      %v1159 = vsel %vm986, %v1125, 0
      %v1162 = vsel %vm986, %v1126, 0
      %v1165 = vsel %vm986, %v1127, 0
      %v1168 = vsel %vm986, %v1128, 0
      %v1171 = vsel %vm986, %v1129, 0
      %v1174 = vsel %vm986, %v1130, 0
      %v1177 = vsel %vm986, %v1131, 0
      %1179 = vmatprep.subr.bf16.mxu0 0
      %1180 = vmatpush1.bf16.msra.mxu0 %v1151
      %1181 = vmatprep.subr.bf16.mxu0 0
      %1182 = vmatpush1.bf16.msra.mxu0 %v1152
      %1183 = vmatprep.subr.bf16.mxu0 0
      %1184 = vmatpush1.bf16.msra.mxu0 0
      %1185 = vmatprep.subr.bf16.mxu0 0
      %1186 = vmatpush1.bf16.msra.mxu0 0
      %1187 = vmatprep.subr.bf16.mxu0 0
      %1188 = vmatpush1.bf16.msra.mxu0 0
      %1189 = vmatprep.subr.bf16.mxu0 0
      %1190 = vmatpush1.bf16.msra.mxu0 0
      %1191 = vmatprep.subr.bf16.mxu0 0
      %1192 = vmatpush1.bf16.msra.mxu0 0
      %1193 = vmatprep.subr.bf16.mxu0 0
      %1194 = vmatpush1.bf16.msra.mxu0 0
      %1195 = vmatprep.subr.bf16.mxu0 0
      %1196 = vmatpush1.bf16.msra.mxu0 0
      %1197 = vmatprep.subr.bf16.mxu0 0
      %1198 = vmatpush1.bf16.msra.mxu0 0
      %1199 = vmatprep.subr.bf16.mxu0 0
      %1200 = vmatpush1.bf16.msra.mxu0 0
      %1201 = vmatprep.subr.bf16.mxu0 0
      %1202 = vmatpush1.bf16.msra.mxu0 0
      %1203 = vmatprep.subr.bf16.mxu0 0
      %1204 = vmatpush1.bf16.msra.mxu0 0
      %1205 = vmatprep.subr.bf16.mxu0 0
      %1206 = vmatpush1.bf16.msra.mxu0 0
      %1207 = vmatprep.subr.bf16.mxu0 0
      %1208 = vmatpush1.bf16.msra.mxu0 0
      %1209 = vmatprep.subr.bf16.mxu0 0
      %1210 = vmatpush1.bf16.msra.mxu0 0
      %1211 = vmatprep.mubr.bf16.mxu0 0
      %1212 = vmatmul.mubr.bf16.gmra.mrb[0].mxu0 %v1156
      %v1213 = vpop.f32.mrb[0].mxu0
      %v1214 = vadd.f32 %v1141, %v1213
      %v1215 = vpop.f32.mrb[0].mxu0
      %v1216 = vpop.f32.mrb[0].mxu0
      %v1217 = vadd.f32 %v1141, %v1216
      %v1218 = vpop.f32.mrb[0].mxu0
      %1219 = vmatprep.mubr.bf16.mxu0 0
      %1220 = vmatmul.mubr.bf16.gmra.mrb[0].mxu0 %v1159
      %v1221 = vpop.f32.mrb[0].mxu0
      %v1222 = vadd.f32 %v1141, %v1221
      %v1223 = vpop.f32.mrb[0].mxu0
      %v1224 = vpop.f32.mrb[0].mxu0
      %v1225 = vadd.f32 %v1141, %v1224
      %v1226 = vpop.f32.mrb[0].mxu0
      %1227 = vmatprep.mubr.bf16.mxu0 0
      %1228 = vmatmul.mubr.bf16.gmra.mrb[0].mxu0 %v1162
      %v1229 = vpop.f32.mrb[0].mxu0
      %v1230 = vadd.f32 %v1141, %v1229
      %v1231 = vpop.f32.mrb[0].mxu0
      %v1232 = vpop.f32.mrb[0].mxu0
      %v1233 = vadd.f32 %v1141, %v1232
      %v1234 = vpop.f32.mrb[0].mxu0
      %1235 = vmatprep.mubr.bf16.mxu0 0
      %1236 = vmatmul.mubr.bf16.gmra.mrb[0].mxu0 %v1165
      %v1237 = vpop.f32.mrb[0].mxu0
      %v1238 = vadd.f32 %v1141, %v1237
      %v1239 = vpop.f32.mrb[0].mxu0
      %v1240 = vpop.f32.mrb[0].mxu0
      %v1241 = vadd.f32 %v1141, %v1240
      %v1242 = vpop.f32.mrb[0].mxu0
      %1243 = vmatprep.mubr.bf16.mxu0 0
      %1244 = vmatmul.mubr.bf16.gmra.mrb[0].mxu0 %v1168
      %v1245 = vpop.f32.mrb[0].mxu0
      %v1246 = vadd.f32 %v1141, %v1245
      %v1247 = vpop.f32.mrb[0].mxu0
      %v1248 = vpop.f32.mrb[0].mxu0
      %v1249 = vadd.f32 %v1141, %v1248
      %v1250 = vpop.f32.mrb[0].mxu0
      %1251 = vmatprep.mubr.bf16.mxu0 0
      %1252 = vmatmul.mubr.bf16.gmra.mrb[0].mxu0 %v1171
      %v1253 = vpop.f32.mrb[0].mxu0
      %v1254 = vadd.f32 %v1141, %v1253
      %v1255 = vpop.f32.mrb[0].mxu0
      %v1256 = vpop.f32.mrb[0].mxu0
      %v1257 = vadd.f32 %v1141, %v1256
      %v1258 = vpop.f32.mrb[0].mxu0
      %1259 = vmatprep.mubr.bf16.mxu0 0
      %1260 = vmatmul.mubr.bf16.gmra.mrb[0].mxu0 %v1174
      %v1261 = vpop.f32.mrb[0].mxu0
      %v1262 = vadd.f32 %v1141, %v1261
      %v1263 = vpop.f32.mrb[0].mxu0
      %v1264 = vpop.f32.mrb[0].mxu0
      %v1265 = vadd.f32 %v1141, %v1264
      %v1266 = vpop.f32.mrb[0].mxu0
      %1267 = vmatprep.mubr.bf16.mxu0 0
      %1268 = vmatmul.mubr.bf16.gmra.mrb[0].mxu0 %v1177
      %v1269 = vpop.f32.mrb[0].mxu0
      %v1270 = vadd.f32 %v1141, %v1269
      %v1271 = vpop.f32.mrb[0].mxu0
      %v1272 = vpop.f32.mrb[0].mxu0
      %v1273 = vadd.f32 %v1141, %v1272
      %v1274 = vpop.f32.mrb[0].mxu0
      %1275 = vdwg.mxu0
      %v1276 = vtanh.pop %v1214
      %v1277 = vtanh.pop %v1217
      %v1278 = vtanh.pop %v1222
      %v1279 = vtanh.pop %v1225
      %v1280 = vtanh.pop %v1230
      %v1281 = vtanh.pop %v1233
      %v1282 = vtanh.pop %v1238
      %v1283 = vtanh.pop %v1241
      %v1284 = vtanh.pop %v1246
      %v1285 = vtanh.pop %v1249
      %v1286 = vtanh.pop %v1254
      %v1287 = vtanh.pop %v1257
      %v1288 = vtanh.pop %v1262
      %v1289 = vtanh.pop %v1265
      %v1290 = vtanh.pop %v1270
      %v1291 = vtanh.pop %v1273
      %v1292 = vld [vmem:[%s596] sm:$0xff]
      %v1293 = vld [vmem:[%s596 + $0x8] sm:$0xff]
      %v1294 = vld [vmem:[%s596 + $0x10] sm:$0xff]
      %v1295 = vld [vmem:[%s596 + $0x18] sm:$0xff]
      %v1296 = vld [vmem:[%s596 + $0x20] sm:$0xff]
      %v1297 = vld [vmem:[%s596 + $0x28] sm:$0xff]
      %v1298 = vld [vmem:[%s596 + $0x30] sm:$0xff]
      %v1299 = vld [vmem:[%s596 + $0x38] sm:$0xff]
      %v1300 = vld [vmem:[%s596 + $0x40] sm:$0xff]
      %v1301 = vld [vmem:[%s596 + $0x48] sm:$0xff]
      %v1302 = vld [vmem:[%s596 + $0x50] sm:$0xff]
      %v1303 = vld [vmem:[%s596 + $0x58] sm:$0xff]
      %v1304 = vld [vmem:[%s596 + $0x60] sm:$0xff]
      %v1305 = vld [vmem:[%s596 + $0x68] sm:$0xff]
      %v1306 = vld [vmem:[%s596 + $0x70] sm:$0xff]
      %v1307 = vld [vmem:[%s596 + $0x78] sm:$0xff]
      %v1308 = vmul.f32 %v1276, 1.442695
      %v1309 = vpow.pop %v1308
      %v1310 = vmul.f32 %v1277, 1.442695
      %v1311 = vpow.pop %v1310
      %v1312 = vmul.f32 %v1278, 1.442695
      %v1313 = vpow.pop %v1312
      %v1314 = vmul.f32 %v1279, 1.442695
      %v1315 = vpow.pop %v1314
      %v1316 = vmul.f32 %v1280, 1.442695
      %v1317 = vpow.pop %v1316
      %v1318 = vmul.f32 %v1281, 1.442695
      %v1319 = vpow.pop %v1318
      %v1320 = vmul.f32 %v1282, 1.442695
      %v1321 = vpow.pop %v1320
      %v1322 = vmul.f32 %v1283, 1.442695
      %v1323 = vpow.pop %v1322
      %v1324 = vmul.f32 %v1284, 1.442695
      %v1325 = vpow.pop %v1324
      %v1326 = vmul.f32 %v1285, 1.442695
      %v1327 = vpow.pop %v1326
      %v1328 = vmul.f32 %v1286, 1.442695
      %v1329 = vpow.pop %v1328
      %v1330 = vmul.f32 %v1287, 1.442695
      %v1331 = vpow.pop %v1330
      %v1332 = vmul.f32 %v1288, 1.442695
      %v1333 = vpow.pop %v1332
      %v1334 = vmul.f32 %v1289, 1.442695
      %v1335 = vpow.pop %v1334
      %v1336 = vmul.f32 %v1290, 1.442695
      %v1337 = vpow.pop %v1336
      %v1338 = vmul.f32 %v1291, 1.442695
      %v1339 = vpow.pop %v1338
      %1356 = vrot.lane.b32.xlu0 %v1309, 120
      %v1357 = vpop.permute.xlu0 %1356
      %1358 = vrot.lane.b32.xlu0 %v1311, 120
      %v1359 = vpop.permute.xlu0 %1358
      %1360 = vrot.lane.b32.xlu0 %v1313, 120
      %v1361 = vpop.permute.xlu0 %1360
      %1362 = vrot.lane.b32.xlu0 %v1315, 120
      %v1363 = vpop.permute.xlu0 %1362
      %1364 = vrot.lane.b32.xlu0 %v1317, 120
      %v1365 = vpop.permute.xlu0 %1364
      %1366 = vrot.lane.b32.xlu0 %v1319, 120
      %v1367 = vpop.permute.xlu0 %1366
      %1368 = vrot.lane.b32.xlu0 %v1321, 120
      %v1369 = vpop.permute.xlu0 %1368
      %1370 = vrot.lane.b32.xlu0 %v1323, 120
      %v1371 = vpop.permute.xlu0 %1370
      %1372 = vrot.lane.b32.xlu0 %v1325, 120
      %v1373 = vpop.permute.xlu0 %1372
      %1374 = vrot.lane.b32.xlu0 %v1327, 120
      %v1375 = vpop.permute.xlu0 %1374
      %1376 = vrot.lane.b32.xlu0 %v1329, 120
      %v1377 = vpop.permute.xlu0 %1376
      %1378 = vrot.lane.b32.xlu0 %v1331, 120
      %v1379 = vpop.permute.xlu0 %1378
      %1380 = vrot.lane.b32.xlu0 %v1333, 120
      %v1381 = vpop.permute.xlu0 %1380
      %1382 = vrot.lane.b32.xlu0 %v1335, 120
      %v1383 = vpop.permute.xlu0 %1382
      %1384 = vrot.lane.b32.xlu0 %v1337, 120
      %v1385 = vpop.permute.xlu0 %1384
      %1386 = vrot.lane.b32.xlu0 %v1339, 120
      %v1387 = vpop.permute.xlu0 %1386
      %v1404 = vmul.f32 %v1292, %v1357
      %v1405 = vmul.f32 %v1293, %v1359
      %v1406 = vmul.f32 %v1294, %v1361
      %v1407 = vmul.f32 %v1295, %v1363
      %v1408 = vmul.f32 %v1296, %v1365
      %v1409 = vmul.f32 %v1297, %v1367
      %v1410 = vmul.f32 %v1298, %v1369
      %v1411 = vmul.f32 %v1299, %v1371
      %v1412 = vmul.f32 %v1300, %v1373
      %v1413 = vmul.f32 %v1301, %v1375
      %v1414 = vmul.f32 %v1302, %v1377
      %v1415 = vmul.f32 %v1303, %v1379
      %v1416 = vmul.f32 %v1304, %v1381
      %v1417 = vmul.f32 %v1305, %v1383
      %v1418 = vmul.f32 %v1306, %v1385
      %v1419 = vmul.f32 %v1307, %v1387
      %v1420 = vadd.f32 %v1276, %v1404
      %v1421 = vadd.f32 %v1277, %v1405
      %v1422 = vadd.f32 %v1278, %v1406
      %v1423 = vadd.f32 %v1279, %v1407
      %v1424 = vadd.f32 %v1280, %v1408
      %v1425 = vadd.f32 %v1281, %v1409
      %v1426 = vadd.f32 %v1282, %v1410
      %v1427 = vadd.f32 %v1283, %v1411
      %v1428 = vadd.f32 %v1284, %v1412
      %v1429 = vadd.f32 %v1285, %v1413
      %v1430 = vadd.f32 %v1286, %v1414
      %v1431 = vadd.f32 %v1287, %v1415
      %v1432 = vadd.f32 %v1288, %v1416
      %v1433 = vadd.f32 %v1289, %v1417
      %v1434 = vadd.f32 %v1290, %v1418
      %v1435 = vadd.f32 %v1291, %v1419
      %v1436 = vpack.c.bf16 %v1421, %v1420
      %v1437 = vpack.c.bf16 %v1423, %v1422
      %v1438 = vpack.c.bf16 %v1425, %v1424
      %v1439 = vpack.c.bf16 %v1427, %v1426
      %v1440 = vpack.c.bf16 %v1429, %v1428
      %v1441 = vpack.c.bf16 %v1431, %v1430
      %v1442 = vpack.c.bf16 %v1433, %v1432
      %v1443 = vpack.c.bf16 %v1435, %v1434
      %v1444 = vld [vmem:[%s7] sm:$0xf]
      %1461 = vrot.lane.b32.xlu0 %v700, 96
      %v1462 = vpop.permute.xlu0 %1461
      %1463 = vrot.lane.b32.xlu0 %v703, 96
      %v1464 = vpop.permute.xlu0 %1463
      %1465 = vrot.lane.b32.xlu0 %v708, 96
      %v1466 = vpop.permute.xlu0 %1465
      %1467 = vrot.lane.b32.xlu0 %v711, 96
      %v1468 = vpop.permute.xlu0 %1467
      %1469 = vrot.lane.b32.xlu0 %v716, 96
      %v1470 = vpop.permute.xlu0 %1469
      %1471 = vrot.lane.b32.xlu0 %v719, 96
      %v1472 = vpop.permute.xlu0 %1471
      %1473 = vrot.lane.b32.xlu0 %v724, 96
      %v1474 = vpop.permute.xlu0 %1473
      %1475 = vrot.lane.b32.xlu0 %v727, 96
      %v1476 = vpop.permute.xlu0 %1475
      %1477 = vrot.lane.b32.xlu0 %v732, 96
      %v1478 = vpop.permute.xlu0 %1477
      %1479 = vrot.lane.b32.xlu0 %v735, 96
      %v1480 = vpop.permute.xlu0 %1479
      %1481 = vrot.lane.b32.xlu0 %v740, 96
      %v1482 = vpop.permute.xlu0 %1481
      %1483 = vrot.lane.b32.xlu0 %v743, 96
      %v1484 = vpop.permute.xlu0 %1483
      %1485 = vrot.lane.b32.xlu0 %v748, 96
      %v1486 = vpop.permute.xlu0 %1485
      %1487 = vrot.lane.b32.xlu0 %v751, 96
      %v1488 = vpop.permute.xlu0 %1487
      %1489 = vrot.lane.b32.xlu0 %v756, 96
      %v1490 = vpop.permute.xlu0 %1489
      %1491 = vrot.lane.b32.xlu0 %v759, 96
      %v1492 = vpop.permute.xlu0 %1491
      %vm1509 = vcmask 64512
      %v1511 = vsel %vm1509, %v1436, 0
      %v1514 = vsel %vm1509, %v1437, 0
      %v1517 = vsel %vm1509, %v1438, 0
      %v1520 = vsel %vm1509, %v1439, 0
      %v1523 = vsel %vm1509, %v1440, 0
      %v1526 = vsel %vm1509, %v1441, 0
      %v1529 = vsel %vm1509, %v1442, 0
      %v1532 = vsel %vm1509, %v1443, 0
      %vm1534 = vcmask 1043456
      %v1536 = vsel %vm1534, %v1444, 0
      %1538 = vmatprep.subr.bf16.mxu0 0
      %1539 = vmatpush1.bf16.msra.mxu0 %v1536
      %1540 = vmatprep.subr.bf16.mxu0 0
      %1541 = vmatpush1.bf16.msra.mxu0 0
      %1542 = vmatprep.subr.bf16.mxu0 0
      %1543 = vmatpush1.bf16.msra.mxu0 0
      %1544 = vmatprep.subr.bf16.mxu0 0
      %1545 = vmatpush1.bf16.msra.mxu0 0
      %1546 = vmatprep.subr.bf16.mxu0 0
      %1547 = vmatpush1.bf16.msra.mxu0 0
      %1548 = vmatprep.subr.bf16.mxu0 0
      %1549 = vmatpush1.bf16.msra.mxu0 0
      %1550 = vmatprep.subr.bf16.mxu0 0
      %1551 = vmatpush1.bf16.msra.mxu0 0
      %1552 = vmatprep.subr.bf16.mxu0 0
      %1553 = vmatpush1.bf16.msra.mxu0 0
      %1554 = vmatprep.subr.bf16.mxu0 0
      %1555 = vmatpush1.bf16.msra.mxu0 0
      %1556 = vmatprep.subr.bf16.mxu0 0
      %1557 = vmatpush1.bf16.msra.mxu0 0
      %1558 = vmatprep.subr.bf16.mxu0 0
      %1559 = vmatpush1.bf16.msra.mxu0 0
      %1560 = vmatprep.subr.bf16.mxu0 0
      %1561 = vmatpush1.bf16.msra.mxu0 0
      %1562 = vmatprep.subr.bf16.mxu0 0
      %1563 = vmatpush1.bf16.msra.mxu0 0
      %1564 = vmatprep.subr.bf16.mxu0 0
      %1565 = vmatpush1.bf16.msra.mxu0 0
      %1566 = vmatprep.subr.bf16.mxu0 0
      %1567 = vmatpush1.bf16.msra.mxu0 0
      %1568 = vmatprep.subr.bf16.mxu0 0
      %1569 = vmatpush1.bf16.msra.mxu0 0
      %1570 = vmatprep.mubr.bf16.mxu0 0
      %1571 = vmatmul.mubr.bf16.gmra.mrb[0].mxu0 %v1511
      %v1572 = vpop.f32.mrb[0].mxu0
      %v1573 = vadd.f32 %v1462, %v1572
      %v1574 = vpop.f32.mrb[0].mxu0
      %v1575 = vpop.f32.mrb[0].mxu0
      %v1576 = vadd.f32 %v1464, %v1575
      %v1577 = vpop.f32.mrb[0].mxu0
      %1578 = vmatprep.mubr.bf16.mxu0 0
      %1579 = vmatmul.mubr.bf16.gmra.mrb[0].mxu0 %v1514
      %v1580 = vpop.f32.mrb[0].mxu0
      %v1581 = vadd.f32 %v1466, %v1580
      %v1582 = vpop.f32.mrb[0].mxu0
      %v1583 = vpop.f32.mrb[0].mxu0
      %v1584 = vadd.f32 %v1468, %v1583
      %v1585 = vpop.f32.mrb[0].mxu0
      %1586 = vmatprep.mubr.bf16.mxu0 0
      %1587 = vmatmul.mubr.bf16.gmra.mrb[0].mxu0 %v1517
      %v1588 = vpop.f32.mrb[0].mxu0
      %v1589 = vadd.f32 %v1470, %v1588
      %v1590 = vpop.f32.mrb[0].mxu0
      %v1591 = vpop.f32.mrb[0].mxu0
      %v1592 = vadd.f32 %v1472, %v1591
      %v1593 = vpop.f32.mrb[0].mxu0
      %1594 = vmatprep.mubr.bf16.mxu0 0
      %1595 = vmatmul.mubr.bf16.gmra.mrb[0].mxu0 %v1520
      %v1596 = vpop.f32.mrb[0].mxu0
      %v1597 = vadd.f32 %v1474, %v1596
      %v1598 = vpop.f32.mrb[0].mxu0
      %v1599 = vpop.f32.mrb[0].mxu0
      %v1600 = vadd.f32 %v1476, %v1599
      %v1601 = vpop.f32.mrb[0].mxu0
      %1602 = vmatprep.mubr.bf16.mxu0 0
      %1603 = vmatmul.mubr.bf16.gmra.mrb[0].mxu0 %v1523
      %v1604 = vpop.f32.mrb[0].mxu0
      %v1605 = vadd.f32 %v1478, %v1604
      %v1606 = vpop.f32.mrb[0].mxu0
      %v1607 = vpop.f32.mrb[0].mxu0
      %v1608 = vadd.f32 %v1480, %v1607
      %v1609 = vpop.f32.mrb[0].mxu0
      %1610 = vmatprep.mubr.bf16.mxu0 0
      %1611 = vmatmul.mubr.bf16.gmra.mrb[0].mxu0 %v1526
      %v1612 = vpop.f32.mrb[0].mxu0
      %v1613 = vadd.f32 %v1482, %v1612
      %v1614 = vpop.f32.mrb[0].mxu0
      %v1615 = vpop.f32.mrb[0].mxu0
      %v1616 = vadd.f32 %v1484, %v1615
      %v1617 = vpop.f32.mrb[0].mxu0
      %1618 = vmatprep.mubr.bf16.mxu0 0
      %1619 = vmatmul.mubr.bf16.gmra.mrb[0].mxu0 %v1529
      %v1620 = vpop.f32.mrb[0].mxu0
      %v1621 = vadd.f32 %v1486, %v1620
      %v1622 = vpop.f32.mrb[0].mxu0
      %v1623 = vpop.f32.mrb[0].mxu0
      %v1624 = vadd.f32 %v1488, %v1623
      %v1625 = vpop.f32.mrb[0].mxu0
      %1626 = vmatprep.mubr.bf16.mxu0 0
      %1627 = vmatmul.mubr.bf16.gmra.mrb[0].mxu0 %v1532
      %v1628 = vpop.f32.mrb[0].mxu0
      %v1629 = vadd.f32 %v1490, %v1628
      %v1630 = vpop.f32.mrb[0].mxu0
      %v1631 = vpop.f32.mrb[0].mxu0
      %v1632 = vadd.f32 %v1492, %v1631
      %v1633 = vpop.f32.mrb[0].mxu0
      %1634 = vdwg.mxu0
      %v1635 = vld [vmem:[%s13] sm:$0x1]
      %v1637 = vlaneseq
      %v1638 = vshrl.u32 %v1637, 7
      %v1639 = vsub.s32 0, %v1638
      %v1640 = vrot.slane %v1635, %v1639
      %v1642 = vadd.f32 %v1573, %v1640
      %v1643 = vadd.f32 %v1576, %v1640
      %v1644 = vadd.f32 %v1581, %v1640
      %v1645 = vadd.f32 %v1584, %v1640
      %v1646 = vadd.f32 %v1589, %v1640
      %v1647 = vadd.f32 %v1592, %v1640
      %v1648 = vadd.f32 %v1597, %v1640
      %v1649 = vadd.f32 %v1600, %v1640
      %v1650 = vadd.f32 %v1605, %v1640
      %v1651 = vadd.f32 %v1608, %v1640
      %v1652 = vadd.f32 %v1613, %v1640
      %v1653 = vadd.f32 %v1616, %v1640
      %v1654 = vadd.f32 %v1621, %v1640
      %v1655 = vadd.f32 %v1624, %v1640
      %v1656 = vadd.f32 %v1629, %v1640
      %v1657 = vadd.f32 %v1632, %v1640
      %v1658 = vmax.f32 %v1642, 0.0
      %v1659 = vmax.f32 %v1643, 0.0
      %v1660 = vmax.f32 %v1644, 0.0
      %v1661 = vmax.f32 %v1645, 0.0
      %v1662 = vmax.f32 %v1646, 0.0
      %v1663 = vmax.f32 %v1647, 0.0
      %v1664 = vmax.f32 %v1648, 0.0
      %v1665 = vmax.f32 %v1649, 0.0
      %v1666 = vmax.f32 %v1650, 0.0
      %v1667 = vmax.f32 %v1651, 0.0
      %v1668 = vmax.f32 %v1652, 0.0
      %v1669 = vmax.f32 %v1653, 0.0
      %v1670 = vmax.f32 %v1654, 0.0
      %v1671 = vmax.f32 %v1655, 0.0
      %v1672 = vmax.f32 %v1656, 0.0
      %v1673 = vmax.f32 %v1657, 0.0
      %v1674 = vpack.c.bf16 %v1659, %v1658
      %v1675 = vpack.c.bf16 %v1661, %v1660
      %v1676 = vpack.c.bf16 %v1663, %v1662
      %v1677 = vpack.c.bf16 %v1665, %v1664
      %v1678 = vpack.c.bf16 %v1667, %v1666
      %v1679 = vpack.c.bf16 %v1669, %v1668
      %v1680 = vpack.c.bf16 %v1671, %v1670
      %v1681 = vpack.c.bf16 %v1673, %v1672
      %v1682 = vld [vmem:[%s8] sm:$0xf]
      %v1683 = vld [vmem:[%s8 + $0x4] sm:$0xf]
      %v1684 = vld [vmem:[%s8 + $0x8] sm:$0xf]
      %v1685 = vld [vmem:[%s8 + $0xc] sm:$0xf]
      %v1686 = vld [vmem:[%s14] sm:$0x1]
      %v1688 = vlaneseq
      %v1689 = vshrl.u32 %v1688, 7
      %v1690 = vsub.s32 0, %v1689
      %v1691 = vrot.slane %v1686, %v1690
      %v1697 = vunpack.c.l.b16 %v1682
      %v1698 = vunpack.c.l.b16 %v1683
      %v1699 = vunpack.c.l.b16 %v1684
      %v1700 = vunpack.c.l.b16 %v1685
      %v1701 = vpack.c.b16 %v1698, %v1697
      %v1702 = vpack.c.b16 %v1700, %v1699
      %v1706 = vsel %vm986, %v1674, 0
      %v1709 = vsel %vm986, %v1675, 0
      %v1712 = vsel %vm986, %v1676, 0
      %v1715 = vsel %vm986, %v1677, 0
      %v1718 = vsel %vm986, %v1678, 0
      %v1721 = vsel %vm986, %v1679, 0
      %v1724 = vsel %vm986, %v1680, 0
      %v1727 = vsel %vm986, %v1681, 0
      %1729 = vmatprep.subr.bf16.mxu0 0
      %1730 = vmatpush1.bf16.msra.mxu0 %v1701
      %1731 = vmatprep.subr.bf16.mxu0 0
      %1732 = vmatpush1.bf16.msra.mxu0 %v1702
      %1733 = vmatprep.subr.bf16.mxu0 0
      %1734 = vmatpush1.bf16.msra.mxu0 0
      %1735 = vmatprep.subr.bf16.mxu0 0
      %1736 = vmatpush1.bf16.msra.mxu0 0
      %1737 = vmatprep.subr.bf16.mxu0 0
      %1738 = vmatpush1.bf16.msra.mxu0 0
      %1739 = vmatprep.subr.bf16.mxu0 0
      %1740 = vmatpush1.bf16.msra.mxu0 0
      %1741 = vmatprep.subr.bf16.mxu0 0
      %1742 = vmatpush1.bf16.msra.mxu0 0
      %1743 = vmatprep.subr.bf16.mxu0 0
      %1744 = vmatpush1.bf16.msra.mxu0 0
      %1745 = vmatprep.subr.bf16.mxu0 0
      %1746 = vmatpush1.bf16.msra.mxu0 0
      %1747 = vmatprep.subr.bf16.mxu0 0
      %1748 = vmatpush1.bf16.msra.mxu0 0
      %1749 = vmatprep.subr.bf16.mxu0 0
      %1750 = vmatpush1.bf16.msra.mxu0 0
      %1751 = vmatprep.subr.bf16.mxu0 0
      %1752 = vmatpush1.bf16.msra.mxu0 0
      %1753 = vmatprep.subr.bf16.mxu0 0
      %1754 = vmatpush1.bf16.msra.mxu0 0
      %1755 = vmatprep.subr.bf16.mxu0 0
      %1756 = vmatpush1.bf16.msra.mxu0 0
      %1757 = vmatprep.subr.bf16.mxu0 0
      %1758 = vmatpush1.bf16.msra.mxu0 0
      %1759 = vmatprep.subr.bf16.mxu0 0
      %1760 = vmatpush1.bf16.msra.mxu0 0
      %1761 = vmatprep.mubr.bf16.mxu0 0
      %1762 = vmatmul.mubr.bf16.gmra.mrb[0].mxu0 %v1706
      %v1763 = vpop.f32.mrb[0].mxu0
      %v1764 = vadd.f32 %v1691, %v1763
      %v1765 = vpop.f32.mrb[0].mxu0
      %v1766 = vpop.f32.mrb[0].mxu0
      %v1767 = vadd.f32 %v1691, %v1766
      %v1768 = vpop.f32.mrb[0].mxu0
      %1769 = vmatprep.mubr.bf16.mxu0 0
      %1770 = vmatmul.mubr.bf16.gmra.mrb[0].mxu0 %v1709
      %v1771 = vpop.f32.mrb[0].mxu0
      %v1772 = vadd.f32 %v1691, %v1771
      %v1773 = vpop.f32.mrb[0].mxu0
      %v1774 = vpop.f32.mrb[0].mxu0
      %v1775 = vadd.f32 %v1691, %v1774
      %v1776 = vpop.f32.mrb[0].mxu0
      %1777 = vmatprep.mubr.bf16.mxu0 0
      %1778 = vmatmul.mubr.bf16.gmra.mrb[0].mxu0 %v1712
      %v1779 = vpop.f32.mrb[0].mxu0
      %v1780 = vadd.f32 %v1691, %v1779
      %v1781 = vpop.f32.mrb[0].mxu0
      %v1782 = vpop.f32.mrb[0].mxu0
      %v1783 = vadd.f32 %v1691, %v1782
      %v1784 = vpop.f32.mrb[0].mxu0
      %1785 = vmatprep.mubr.bf16.mxu0 0
      %1786 = vmatmul.mubr.bf16.gmra.mrb[0].mxu0 %v1715
      %v1787 = vpop.f32.mrb[0].mxu0
      %v1788 = vadd.f32 %v1691, %v1787
      %v1789 = vpop.f32.mrb[0].mxu0
      %v1790 = vpop.f32.mrb[0].mxu0
      %v1791 = vadd.f32 %v1691, %v1790
      %v1792 = vpop.f32.mrb[0].mxu0
      %1793 = vmatprep.mubr.bf16.mxu0 0
      %1794 = vmatmul.mubr.bf16.gmra.mrb[0].mxu0 %v1718
      %v1795 = vpop.f32.mrb[0].mxu0
      %v1796 = vadd.f32 %v1691, %v1795
      %v1797 = vpop.f32.mrb[0].mxu0
      %v1798 = vpop.f32.mrb[0].mxu0
      %v1799 = vadd.f32 %v1691, %v1798
      %v1800 = vpop.f32.mrb[0].mxu0
      %1801 = vmatprep.mubr.bf16.mxu0 0
      %1802 = vmatmul.mubr.bf16.gmra.mrb[0].mxu0 %v1721
      %v1803 = vpop.f32.mrb[0].mxu0
      %v1804 = vadd.f32 %v1691, %v1803
      %v1805 = vpop.f32.mrb[0].mxu0
      %v1806 = vpop.f32.mrb[0].mxu0
      %v1807 = vadd.f32 %v1691, %v1806
      %v1808 = vpop.f32.mrb[0].mxu0
      %1809 = vmatprep.mubr.bf16.mxu0 0
      %1810 = vmatmul.mubr.bf16.gmra.mrb[0].mxu0 %v1724
      %v1811 = vpop.f32.mrb[0].mxu0
      %v1812 = vadd.f32 %v1691, %v1811
      %v1813 = vpop.f32.mrb[0].mxu0
      %v1814 = vpop.f32.mrb[0].mxu0
      %v1815 = vadd.f32 %v1691, %v1814
      %v1816 = vpop.f32.mrb[0].mxu0
      %1817 = vmatprep.mubr.bf16.mxu0 0
      %1818 = vmatmul.mubr.bf16.gmra.mrb[0].mxu0 %v1727
      %v1819 = vpop.f32.mrb[0].mxu0
      %v1820 = vadd.f32 %v1691, %v1819
      %v1821 = vpop.f32.mrb[0].mxu0
      %v1822 = vpop.f32.mrb[0].mxu0
      %v1823 = vadd.f32 %v1691, %v1822
      %v1824 = vpop.f32.mrb[0].mxu0
      %1825 = vdwg.mxu0
      %v1826 = vmax.f32 %v1764, 0.0
      %v1827 = vmax.f32 %v1767, 0.0
      %v1828 = vmax.f32 %v1772, 0.0
      %v1829 = vmax.f32 %v1775, 0.0
      %v1830 = vmax.f32 %v1780, 0.0
      %v1831 = vmax.f32 %v1783, 0.0
      %v1832 = vmax.f32 %v1788, 0.0
      %v1833 = vmax.f32 %v1791, 0.0
      %v1834 = vmax.f32 %v1796, 0.0
      %v1835 = vmax.f32 %v1799, 0.0
      %v1836 = vmax.f32 %v1804, 0.0
      %v1837 = vmax.f32 %v1807, 0.0
      %v1838 = vmax.f32 %v1812, 0.0
      %v1839 = vmax.f32 %v1815, 0.0
      %v1840 = vmax.f32 %v1820, 0.0
      %v1841 = vmax.f32 %v1823, 0.0
      %v1842 = vpack.c.bf16 %v1827, %v1826
      %v1843 = vpack.c.bf16 %v1829, %v1828
      %v1844 = vpack.c.bf16 %v1831, %v1830
      %v1845 = vpack.c.bf16 %v1833, %v1832
      %v1846 = vpack.c.bf16 %v1835, %v1834
      %v1847 = vpack.c.bf16 %v1837, %v1836
      %v1848 = vpack.c.bf16 %v1839, %v1838
      %v1849 = vpack.c.bf16 %v1841, %v1840
      %v1850 = vld [vmem:[%s9] sm:$0xf]
      %v1851 = vld [vmem:[%s9 + $0x4] sm:$0xf]
      %v1852 = vld [vmem:[%s9 + $0x8] sm:$0xf]
      %v1853 = vld [vmem:[%s9 + $0xc] sm:$0xf]
      %v1854 = vld [vmem:[%s15] sm:$0x1]
      %v1856 = vlaneseq
      %v1857 = vshrl.u32 %v1856, 7
      %v1858 = vsub.s32 0, %v1857
      %v1859 = vrot.slane %v1854, %v1858
      %v1865 = vunpack.c.l.b16 %v1850
      %v1866 = vunpack.c.l.b16 %v1851
      %v1867 = vunpack.c.l.b16 %v1852
      %v1868 = vunpack.c.l.b16 %v1853
      %v1869 = vpack.c.b16 %v1866, %v1865
      %v1870 = vpack.c.b16 %v1868, %v1867
      %v1874 = vsel %vm986, %v1842, 0
      %v1877 = vsel %vm986, %v1843, 0
      %v1880 = vsel %vm986, %v1844, 0
      %v1883 = vsel %vm986, %v1845, 0
      %v1886 = vsel %vm986, %v1846, 0
      %v1889 = vsel %vm986, %v1847, 0
      %v1892 = vsel %vm986, %v1848, 0
      %v1895 = vsel %vm986, %v1849, 0
      %1897 = vmatprep.subr.bf16.mxu0 0
      %1898 = vmatpush1.bf16.msra.mxu0 %v1869
      %1899 = vmatprep.subr.bf16.mxu0 0
      %1900 = vmatpush1.bf16.msra.mxu0 %v1870
      %1901 = vmatprep.subr.bf16.mxu0 0
      %1902 = vmatpush1.bf16.msra.mxu0 0
      %1903 = vmatprep.subr.bf16.mxu0 0
      %1904 = vmatpush1.bf16.msra.mxu0 0
      %1905 = vmatprep.subr.bf16.mxu0 0
      %1906 = vmatpush1.bf16.msra.mxu0 0
      %1907 = vmatprep.subr.bf16.mxu0 0
      %1908 = vmatpush1.bf16.msra.mxu0 0
      %1909 = vmatprep.subr.bf16.mxu0 0
      %1910 = vmatpush1.bf16.msra.mxu0 0
      %1911 = vmatprep.subr.bf16.mxu0 0
      %1912 = vmatpush1.bf16.msra.mxu0 0
      %1913 = vmatprep.subr.bf16.mxu0 0
      %1914 = vmatpush1.bf16.msra.mxu0 0
      %1915 = vmatprep.subr.bf16.mxu0 0
      %1916 = vmatpush1.bf16.msra.mxu0 0
      %1917 = vmatprep.subr.bf16.mxu0 0
      %1918 = vmatpush1.bf16.msra.mxu0 0
      %1919 = vmatprep.subr.bf16.mxu0 0
      %1920 = vmatpush1.bf16.msra.mxu0 0
      %1921 = vmatprep.subr.bf16.mxu0 0
      %1922 = vmatpush1.bf16.msra.mxu0 0
      %1923 = vmatprep.subr.bf16.mxu0 0
      %1924 = vmatpush1.bf16.msra.mxu0 0
      %1925 = vmatprep.subr.bf16.mxu0 0
      %1926 = vmatpush1.bf16.msra.mxu0 0
      %1927 = vmatprep.subr.bf16.mxu0 0
      %1928 = vmatpush1.bf16.msra.mxu0 0
      %1929 = vmatprep.mubr.bf16.mxu0 0
      %1930 = vmatmul.mubr.bf16.gmra.mrb[0].mxu0 %v1874
      %v1931 = vpop.f32.mrb[0].mxu0
      %v1932 = vadd.f32 %v1859, %v1931
      %v1933 = vpop.f32.mrb[0].mxu0
      %v1934 = vpop.f32.mrb[0].mxu0
      %v1935 = vadd.f32 %v1859, %v1934
      %v1936 = vpop.f32.mrb[0].mxu0
      %1937 = vmatprep.mubr.bf16.mxu0 0
      %1938 = vmatmul.mubr.bf16.gmra.mrb[0].mxu0 %v1877
      %v1939 = vpop.f32.mrb[0].mxu0
      %v1940 = vadd.f32 %v1859, %v1939
      %v1941 = vpop.f32.mrb[0].mxu0
      %v1942 = vpop.f32.mrb[0].mxu0
      %v1943 = vadd.f32 %v1859, %v1942
      %v1944 = vpop.f32.mrb[0].mxu0
      %1945 = vmatprep.mubr.bf16.mxu0 0
      %1946 = vmatmul.mubr.bf16.gmra.mrb[0].mxu0 %v1880
      %v1947 = vpop.f32.mrb[0].mxu0
      %v1948 = vadd.f32 %v1859, %v1947
      %v1949 = vpop.f32.mrb[0].mxu0
      %v1950 = vpop.f32.mrb[0].mxu0
      %v1951 = vadd.f32 %v1859, %v1950
      %v1952 = vpop.f32.mrb[0].mxu0
      %1953 = vmatprep.mubr.bf16.mxu0 0
      %1954 = vmatmul.mubr.bf16.gmra.mrb[0].mxu0 %v1883
      %v1955 = vpop.f32.mrb[0].mxu0
      %v1956 = vadd.f32 %v1859, %v1955
      %v1957 = vpop.f32.mrb[0].mxu0
      %v1958 = vpop.f32.mrb[0].mxu0
      %v1959 = vadd.f32 %v1859, %v1958
      %v1960 = vpop.f32.mrb[0].mxu0
      %1961 = vmatprep.mubr.bf16.mxu0 0
      %1962 = vmatmul.mubr.bf16.gmra.mrb[0].mxu0 %v1886
      %v1963 = vpop.f32.mrb[0].mxu0
      %v1964 = vadd.f32 %v1859, %v1963
      %v1965 = vpop.f32.mrb[0].mxu0
      %v1966 = vpop.f32.mrb[0].mxu0
      %v1967 = vadd.f32 %v1859, %v1966
      %v1968 = vpop.f32.mrb[0].mxu0
      %1969 = vmatprep.mubr.bf16.mxu0 0
      %1970 = vmatmul.mubr.bf16.gmra.mrb[0].mxu0 %v1889
      %v1971 = vpop.f32.mrb[0].mxu0
      %v1972 = vadd.f32 %v1859, %v1971
      %v1973 = vpop.f32.mrb[0].mxu0
      %v1974 = vpop.f32.mrb[0].mxu0
      %v1975 = vadd.f32 %v1859, %v1974
      %v1976 = vpop.f32.mrb[0].mxu0
      %1977 = vmatprep.mubr.bf16.mxu0 0
      %1978 = vmatmul.mubr.bf16.gmra.mrb[0].mxu0 %v1892
      %v1979 = vpop.f32.mrb[0].mxu0
      %v1980 = vadd.f32 %v1859, %v1979
      %v1981 = vpop.f32.mrb[0].mxu0
      %v1982 = vpop.f32.mrb[0].mxu0
      %v1983 = vadd.f32 %v1859, %v1982
      %v1984 = vpop.f32.mrb[0].mxu0
      %1985 = vmatprep.mubr.bf16.mxu0 0
      %1986 = vmatmul.mubr.bf16.gmra.mrb[0].mxu0 %v1895
      %v1987 = vpop.f32.mrb[0].mxu0
      %v1988 = vadd.f32 %v1859, %v1987
      %v1989 = vpop.f32.mrb[0].mxu0
      %v1990 = vpop.f32.mrb[0].mxu0
      %v1991 = vadd.f32 %v1859, %v1990
      %v1992 = vpop.f32.mrb[0].mxu0
      %1993 = vdwg.mxu0
      %v1994 = vtanh.pop %v1932
      %v1995 = vtanh.pop %v1935
      %v1996 = vtanh.pop %v1940
      %v1997 = vtanh.pop %v1943
      %v1998 = vtanh.pop %v1948
      %v1999 = vtanh.pop %v1951
      %v2000 = vtanh.pop %v1956
      %v2001 = vtanh.pop %v1959
      %v2002 = vtanh.pop %v1964
      %v2003 = vtanh.pop %v1967
      %v2004 = vtanh.pop %v1972
      %v2005 = vtanh.pop %v1975
      %v2006 = vtanh.pop %v1980
      %v2007 = vtanh.pop %v1983
      %v2008 = vtanh.pop %v1988
      %v2009 = vtanh.pop %v1991
      %2010 = vst.msk [vmem:[%s602] sm:$0xff] %vm794, %v1994
      %2011 = vst.msk [vmem:[%s602 + $0x8] sm:$0xff] %vm794, %v1995
      %2012 = vst.msk [vmem:[%s602 + $0x10] sm:$0xff] %vm794, %v1996
      %2013 = vst.msk [vmem:[%s602 + $0x18] sm:$0xff] %vm794, %v1997
      %2014 = vst.msk [vmem:[%s602 + $0x20] sm:$0xff] %vm794, %v1998
      %2015 = vst.msk [vmem:[%s602 + $0x28] sm:$0xff] %vm794, %v1999
      %2016 = vst.msk [vmem:[%s602 + $0x30] sm:$0xff] %vm794, %v2000
      %2017 = vst.msk [vmem:[%s602 + $0x38] sm:$0xff] %vm794, %v2001
      %2018 = vst.msk [vmem:[%s602 + $0x40] sm:$0xff] %vm794, %v2002
      %2019 = vst.msk [vmem:[%s602 + $0x48] sm:$0xff] %vm794, %v2003
      %2020 = vst.msk [vmem:[%s602 + $0x50] sm:$0xff] %vm794, %v2004
      %2021 = vst.msk [vmem:[%s602 + $0x58] sm:$0xff] %vm794, %v2005
      %2022 = vst.msk [vmem:[%s602 + $0x60] sm:$0xff] %vm794, %v2006
      %2023 = vst.msk [vmem:[%s602 + $0x68] sm:$0xff] %vm794, %v2007
      %2024 = vst.msk [vmem:[%s602 + $0x70] sm:$0xff] %vm794, %v2008
      %2025 = vst.msk [vmem:[%s602 + $0x78] sm:$0xff] %vm794, %v2009
      %2026 = vst.msk [vmem:[%s608] sm:$0xff] %vm794, %v1276
      %2027 = vst.msk [vmem:[%s608 + $0x8] sm:$0xff] %vm794, %v1277
      %2028 = vst.msk [vmem:[%s608 + $0x10] sm:$0xff] %vm794, %v1278
      %2029 = vst.msk [vmem:[%s608 + $0x18] sm:$0xff] %vm794, %v1279
      %2030 = vst.msk [vmem:[%s608 + $0x20] sm:$0xff] %vm794, %v1280
      %2031 = vst.msk [vmem:[%s608 + $0x28] sm:$0xff] %vm794, %v1281
      %2032 = vst.msk [vmem:[%s608 + $0x30] sm:$0xff] %vm794, %v1282
      %2033 = vst.msk [vmem:[%s608 + $0x38] sm:$0xff] %vm794, %v1283
      %2034 = vst.msk [vmem:[%s608 + $0x40] sm:$0xff] %vm794, %v1284
      %2035 = vst.msk [vmem:[%s608 + $0x48] sm:$0xff] %vm794, %v1285
      %2036 = vst.msk [vmem:[%s608 + $0x50] sm:$0xff] %vm794, %v1286
      %2037 = vst.msk [vmem:[%s608 + $0x58] sm:$0xff] %vm794, %v1287
      %2038 = vst.msk [vmem:[%s608 + $0x60] sm:$0xff] %vm794, %v1288
      %2039 = vst.msk [vmem:[%s608 + $0x68] sm:$0xff] %vm794, %v1289
      %2040 = vst.msk [vmem:[%s608 + $0x70] sm:$0xff] %vm794, %v1290
      %2041 = vst.msk [vmem:[%s608 + $0x78] sm:$0xff] %vm794, %v1291
      %s2042 = smul.u32 16, %s29
      %p2043 = scmp.lt.s32.totalorder %s2042, 31
      %s2044 = scalar_select %p2043, %s2042, 31
      %s2045 = smul.addr %s2044, 8
      %s2046 = scalar_lea.vmem %s16, %s2045
      %s2047 = smul.u32 16, %s29
      %p2048 = scmp.lt.s32.totalorder %s2047, 31
      %s2049 = scalar_select %p2048, %s2047, 31
      %s2050 = smul.addr %s2049, 8
      %s2051 = scalar_lea.vmem %s17, %s2050
      // Predicated region
      $region85: #{tpu_custom_call.1} parent=83 // pred_check
        %p2052 = pneg %p398
      $region86: #{tpu_custom_call.1} parent=83 // pred_check_branch
        %2054 = sbr.rel (%p2052) target = $region88
      $region87: #{tpu_custom_call.1} parent=83 // pred_region
        %s2055 = smul.u32 16, %s29
      $region88: #{tpu_custom_call.1} parent=83 // pred_fallthru
        _
      // Predicated region
      $region89: #{tpu_custom_call.1} parent=83 // pred_check
        %p2056 = pneg %p424
      $region90: #{tpu_custom_call.1} parent=83 // pred_check_branch
        %2058 = sbr.rel (%p2056) target = $region92
      $region91: #{tpu_custom_call.1} parent=83 // pred_region
        %s2059 = smul.u32 16, %s29
      $region92: #{tpu_custom_call.1} parent=83 // pred_fallthru
        _
    $region84: #{tpu_custom_call.1} parent=5 // pred_fallthru
      _
    %p2060 = scmp.le.s32.totalorder 2, %s24
    // Predicated region
    $region93: #{tpu_custom_call.1} parent=5 // pred_check
      %p2061 = pneg %p2060
    $region94: #{tpu_custom_call.1} parent=5 // pred_check_branch
      %2063 = sbr.rel (%p2061) target = $region96
    $region95: #{tpu_custom_call.1} parent=5 // pred_region
      %s2064 = ssub.s32 %s24, 2
      // Predicated region
      $region97: #{tpu_custom_call.1} parent=95 // pred_check
        %p2065 = pneg %p404
      $region98: #{tpu_custom_call.1} parent=95 // pred_check_branch
        %2067 = sbr.rel (%p2065) target = $region100
      $region99: #{tpu_custom_call.1} parent=95 // pred_region
        %s2068 = smul.u32 16, %s30
        %p2069 = scmp.lt.s32.totalorder %s2068, 31
        %s2070 = scalar_select %p2069, %s2068, 31
        %s2071 = smul.addr %s2070, 8
        %s2072 = scalar_lea.vmem %s16, %s2071
      $region100: #{tpu_custom_call.1} parent=95 // pred_fallthru
        _
      // Predicated region
      $region101: #{tpu_custom_call.1} parent=95 // pred_check
        %p2073 = pneg %p430
      $region102: #{tpu_custom_call.1} parent=95 // pred_check_branch
        %2075 = sbr.rel (%p2073) target = $region104
      $region103: #{tpu_custom_call.1} parent=95 // pred_region
        %s2076 = smul.u32 16, %s30
        %p2077 = scmp.lt.s32.totalorder %s2076, 31
        %s2078 = scalar_select %p2077, %s2076, 31
        %s2079 = smul.addr %s2078, 8
        %s2080 = scalar_lea.vmem %s17, %s2079
      $region104: #{tpu_custom_call.1} parent=95 // pred_fallthru
        _
    $region96: #{tpu_custom_call.1} parent=5 // pred_fallthru
      _
  $region6: #{tpu_custom_call.1} parent=0 // loop_footer
    %s28 = sadd.s32 1, %s24
  $region7: #{tpu_custom_call.1} parent=0 // loop_footer_branch
    %23 = sbr.rel target = $region3
  $region8: #{tpu_custom_call.1} parent=0 // loop_exit
    _

</llo_original>
